<compile_context>
chip_gen: v5e
topology: v5e:2x2
jax: 0.10.0
libtpu: 0.0.40
codegen_flags: <defaults>
</compile_context>

<pallas_src>
import functools
import math

import numpy as np
import jax
import jax.numpy as jnp
from jax import lax
from jax.experimental import pallas as pl
from jax.experimental.pallas import tpu as pltpu

LN_EPS = 1e-5  # torch.nn.LayerNorm default


# ------------------------------ kernel helpers ------------------------------

def _layernorm(x, gamma, beta):
    mu = jnp.mean(x, axis=-1, keepdims=True)
    var = jnp.mean((x - mu) ** 2, axis=-1, keepdims=True)   # biased, like torch
    return (x - mu) * lax.rsqrt(var + LN_EPS) * gamma + beta


# ------------------------------ fused kernel --------------------------------

def _fused_kernel(x_ref, negr_ref, negc_ref, vec_ref,
                  wqkv_ref, wo_ref, w1_ref, w2_ref,
                  o_ref, x_acc, mask_sc, head_sc, *, heads, dim_head):
    layer = pl.program_id(1)
    n_layers = pl.num_programs(1)

    Bt, N, _ = mask_sc.shape
    M, D = x_acc.shape                      # M = Bt * N (row-flattened batch block)
    inner = heads * dim_head
    mlp_dim = w1_ref.shape[2]

    # Load the batch block and build the additive mask ONCE (layer 0); both stay
    # resident in VMEM scratch across the "arbitrary" layer axis.
    @pl.when(layer == 0)
    def _init():
        x_acc[...] = x_ref[...]                               # (M, D)
        mask_sc[...] = negr_ref[...] + negc_ref[...]          # (Bt,N,1)+(Bt,1,N)

    # Packed per-layer vectors: one DMA stream instead of nine.
    vecs = vec_ref[0]                                         # (9, Vmax)
    ln1g, ln1b = vecs[0:1, :D], vecs[1:2, :D]
    bo = vecs[2:3, :D]
    ln2g, ln2b = vecs[3:4, :D], vecs[4:5, :D]
    b1 = vecs[5:6, :mlp_dim]
    b2 = vecs[6:7, :D]

    x = x_acc[...]                                            # (M, D) residual stream
    mask = mask_sc[...]                                       # (Bt, N, N) additive mask

    # ----------------------- attention block (pre-LN) -----------------------
    xn = _layernorm(x, ln1g, ln1b)                            # (M, D)

    # Single lane-dense QKV projection; scale folded into the Q columns host-side.
    qkv = jnp.dot(xn, wqkv_ref[0],
                  preferred_element_type=jnp.float32)         # (M, 3*inner)
    qkv3 = qkv.reshape(Bt, N, 3 * inner)                      # leading-dim split only

    # Per-head scores / softmax / value.  dim_head is tiny, so the MXU is starved in K
    # here no matter how it is batched (review #10); each head writes its (M, dh) output
    # into a lane slice of head_sc so the output projection below is ONE dense dot.
    for h in range(heads):
        lo = h * dim_head
        q_h = qkv3[:, :, lo:lo + dim_head]                    # (Bt, N, dh)
        k_h = qkv3[:, :, inner + lo:inner + lo + dim_head]
        v_h = qkv3[:, :, 2 * inner + lo:2 * inner + lo + dim_head]

        dots = jnp.einsum('bnd,bmd->bnm', q_h, k_h,
                          preferred_element_type=jnp.float32) + mask     # (Bt,N,N)
        mmax = jnp.max(dots, axis=-1, keepdims=True)
        e = jnp.exp(dots - mmax)
        s = jnp.sum(e, axis=-1, keepdims=True)
        attn = e * pl.reciprocal(s, approx=False)             # exact: keeps 1e-4 tol
        out_h = jnp.einsum('bnm,bmd->bnd', attn, v_h,
                           preferred_element_type=jnp.float32)           # (Bt,N,dh)
        head_sc[:, lo:lo + dim_head] = out_h.reshape(M, dim_head)

    # Fused output projection: one lane-dense (M, inner) @ (inner, D) dot.
    x = jnp.dot(head_sc[...], wo_ref[0],
                preferred_element_type=jnp.float32) + bo + x             # residual

    # --------------------------- feed-forward block --------------------------
    xn2 = _layernorm(x, ln2g, ln2b)
    hpre = jnp.dot(xn2, w1_ref[0], preferred_element_type=jnp.float32) + b1
    # exact (erf-based) GELU — matches torch.nn.GELU() default
    hact = 0.5 * hpre * (1.0 + lax.erf(hpre * (1.0 / math.sqrt(2.0))))
    y = jnp.dot(hact, w2_ref[0], preferred_element_type=jnp.float32) + b2
    x = y + x                                                            # residual

    x_acc[...] = x

    # Final LayerNorm, written once at the last layer (output block index is constant
    # across the "arbitrary" layer axis, so write-back happens after the last layer).
    @pl.when(layer == n_layers - 1)
    def _final():
        fng, fnb = vecs[7:8, :D], vecs[8:9, :D]
        o_ref[...] = _layernorm(x, fng, fnb)


# ------------------------------ host-side glue -------------------------------

def _presence_bias(m_labels, seqLs):
    """O(N) replacement of MaskAttention.get_mask: 0.0 for present positions, -inf for
    positions whose modality is missing; row and column orientations so the kernel
    rebuilds the (N, N) additive mask with one broadcasted add."""
    seg_ids = jnp.concatenate(
        [jnp.full((L,), i, dtype=jnp.int32) for i, L in enumerate(seqLs)])   # (N,)
    present = (m_labels != 0)[:, seg_ids]                                    # (B, N)
    neg = jnp.where(present, 0.0, -jnp.inf).astype(jnp.float32)
    return neg[:, :, None], neg[:, None, :]                                  # (B,N,1),(B,1,N)


def _stack_params(layers, final, heads, dim_head, mlp_dim):
    """Stack per-layer params on a leading depth axis, fold the attention scale into the
    Q weight columns, and pack all small per-layer vectors (plus the final LN params,
    replicated) into one (depth, 9, Vmax) array to consolidate tiny DMA streams."""
    depth = len(layers)
    D = layers[0][0]["wqkv"].shape[0]
    inner = heads * dim_head
    scale = dim_head ** -0.5
    vmax = max(D, mlp_dim)

    def a_stack(k):
        return jnp.stack([att[k] for att, _ in layers])

    def f_stack(k):
        return jnp.stack([ff[k] for _, ff in layers])

    # QKV weight stays (depth, D, 3*inner): lane-dense columns [Q | K | V].
    wqkv = a_stack("wqkv")
    col_scale = jnp.concatenate([jnp.full((inner,), scale, jnp.float32),
                                 jnp.ones((2 * inner,), jnp.float32)])
    wqkv = wqkv * col_scale[None, None, :]                   # fold scale into Q columns

    def pad(v):                                              # (depth, L) -> (depth, Vmax)
        return jnp.pad(v, ((0, 0), (0, vmax - v.shape[-1])))

    rows = [
        pad(a_stack("ln_g")),                                # 0: attn LN gamma
        pad(a_stack("ln_b")),                                # 1: attn LN beta
        pad(a_stack("bo")),                                  # 2: out-proj bias
        pad(f_stack("ln_g")),                                # 3: ff LN gamma
        pad(f_stack("ln_b")),                                # 4: ff LN beta
        pad(f_stack("b1")),                                  # 5: ff hidden bias
        pad(f_stack("b2")),                                  # 6: ff out bias
        pad(jnp.broadcast_to(final["ln_g"][None], (depth, D))),   # 7: final LN gamma
        pad(jnp.broadcast_to(final["ln_b"][None], (depth, D))),   # 8: final LN beta
    ]
    vecs = jnp.stack(rows, axis=1)                           # (depth, 9, Vmax)

    return dict(vecs=vecs, wqkv=wqkv, wo=a_stack("wo"),
                w1=f_stack("w1"), w2=f_stack("w2"))


def fusion_transformer(x, m_labels, layers, final, *, seqLs, heads, dim_head,
                       batch_block=None):
    B, N, D = x.shape
    depth = len(layers)
    mlp_dim = layers[0][1]["w1"].shape[1]
    inner = heads * dim_head
    vmax = max(D, mlp_dim)

    Bt = B if batch_block is None else batch_block           # whole batch per step:
    assert B % Bt == 0                                       # weights streamed once/block

    p = _stack_params(layers, final, heads, dim_head, mlp_dim)
    neg_row, neg_col = _presence_bias(m_labels, seqLs)

    x2 = x.reshape(B * N, D)                                 # row-flattened activations

    kern = functools.partial(_fused_kernel, heads=heads, dim_head=dim_head)

    in_specs = [
        pl.BlockSpec((Bt * N, D), lambda b, l: (b, 0)),          # x (flattened rows)
        pl.BlockSpec((Bt, N, 1), lambda b, l: (b, 0, 0)),        # neg_row bias
        pl.BlockSpec((Bt, 1, N), lambda b, l: (b, 0, 0)),        # neg_col bias
        pl.BlockSpec((1, 9, vmax), lambda b, l: (l, 0, 0)),      # packed per-layer vecs
        pl.BlockSpec((1, D, 3 * inner), lambda b, l: (l, 0, 0)),  # wqkv (Q pre-scaled)
        pl.BlockSpec((1, inner, D), lambda b, l: (l, 0, 0)),     # wo
        pl.BlockSpec((1, D, mlp_dim), lambda b, l: (l, 0, 0)),   # w1
        pl.BlockSpec((1, mlp_dim, D), lambda b, l: (l, 0, 0)),   # w2
    ]

    out = pl.pallas_call(
        kern,
        out_shape=jax.ShapeDtypeStruct((B * N, D), jnp.float32),
        grid=(B // Bt, depth),
        in_specs=in_specs,
        out_specs=pl.BlockSpec((Bt * N, D), lambda b, l: (b, 0)),
        scratch_shapes=[
            pltpu.VMEM((Bt * N, D), jnp.float32),       # resident activation
            pltpu.VMEM((Bt, N, N), jnp.float32),        # additive mask (built once)
            pltpu.VMEM((Bt * N, inner), jnp.float32),   # per-head outputs (lane slices)
        ],
        compiler_params=pltpu.CompilerParams(
            dimension_semantics=("parallel", "arbitrary")),
        # NOTE: at realistic dims, set vmem_limit_bytes here (raise above 16 MiB default
        # on v5e; budget <=64 MiB / split w1,w2 or bf16-cast weights on v7x).
    )(x2, neg_row, neg_col, p["vecs"], p["wqkv"], p["wo"], p["w1"], p["w2"])

    return out.reshape(B, N, D)


def init_params(key, dim, depth, heads, dim_head, mlp_dim):
    inner = heads * dim_head
    layers = []
    for l in range(depth):
        ks = jax.random.split(jax.random.fold_in(key, l), 6)
        attn = dict(
            ln_g=jnp.ones((dim,), jnp.float32),
            ln_b=jnp.zeros((dim,), jnp.float32),
            wqkv=(jax.random.normal(ks[0], (dim, 3 * inner)) * dim ** -0.5).astype(jnp.float32),
            wo=(jax.random.normal(ks[1], (inner, dim)) * inner ** -0.5).astype(jnp.float32),
            bo=(jax.random.normal(ks[2], (dim,)) * 0.02).astype(jnp.float32),
        )
        ff = dict(
            ln_g=jnp.ones((dim,), jnp.float32),
            ln_b=jnp.zeros((dim,), jnp.float32),
            w1=(jax.random.normal(ks[3], (dim, mlp_dim)) * dim ** -0.5).astype(jnp.float32),
            b1=(jax.random.normal(ks[4], (mlp_dim,)) * 0.02).astype(jnp.float32),
            w2=(jax.random.normal(ks[5], (mlp_dim, dim)) * mlp_dim ** -0.5).astype(jnp.float32),
            b2=jnp.zeros((dim,), jnp.float32),
        )
        layers.append((attn, ff))
    final = dict(ln_g=jnp.ones((dim,), jnp.float32),
                 ln_b=jnp.zeros((dim,), jnp.float32))
    return layers, final


# ----------------------------- pure-JAX reference ----------------------------

def build_mask(m_labels, seqLs):
    seg_ids = jnp.concatenate(
        [jnp.full((L,), i, dtype=jnp.int32) for i, L in enumerate(seqLs)])
    present = (m_labels != 0)[:, seg_ids]
    missing = ~present
    bad = missing[:, :, None] | missing[:, None, :]
    return jnp.where(bad, -jnp.inf, 0.0).astype(jnp.float32)


def _ln_ref(x, g, b):
    mu = jnp.mean(x, axis=-1, keepdims=True)
    var = jnp.mean((x - mu) ** 2, axis=-1, keepdims=True)
    return (x - mu) / jnp.sqrt(var + LN_EPS) * g + b


def reference(x, m_labels, layers, final, *, seqLs, heads, dim_head):
    B, N, _ = x.shape
    inner = heads * dim_head
    scale = dim_head ** -0.5
    mask = build_mask(m_labels, seqLs)[:, None]                        # (B,1,N,N)
    for a, f in layers:
        xn = _ln_ref(x, a["ln_g"], a["ln_b"])
        q, k, v = jnp.split(xn @ a["wqkv"], 3, axis=-1)
        to_h = lambda t: t.reshape(B, N, heads, dim_head).transpose(0, 2, 1, 3)
        q, k, v = map(to_h, (q, k, v))
        dots = jnp.einsum("bhnd,bhmd->bhnm", q, k) * scale + mask
        m = jnp.max(dots, axis=-1, keepdims=True)
        e = jnp.exp(dots - m)
        attn = e / jnp.sum(e, axis=-1, keepdims=True)
        out = jnp.einsum("bhnm,bhmd->bhnd", attn, v)
        out = out.transpose(0, 2, 1, 3).reshape(B, N, inner)
        x = out @ a["wo"] + a["bo"] + x
        xn = _ln_ref(x, f["ln_g"], f["ln_b"])
        h = xn @ f["w1"] + f["b1"]
        h = 0.5 * h * (1.0 + lax.erf(h / jnp.sqrt(2.0)))
        x = h @ f["w2"] + f["b2"] + x
    return _ln_ref(x, final["ln_g"], final["ln_b"])


# ------------------------------------ main ------------------------------------

if __name__ == "__main__":
    dim, depth, heads, dim_head, mlp_dim = 32, 2, 4, 8, 64
    seqLs = [4, 4]
    B, N = 2, sum(seqLs)

    key = jax.random.PRNGKey(0)
    kx, kp = jax.random.split(key)
    x = jax.random.normal(kx, (B, N, dim), dtype=jnp.float32)
    # batch 0: both modalities present; batch 1: modality 1 missing
    # (missing modality -> all -inf mask row -> NaN after softmax, same as torch)
    m_labels = jnp.array([[1, 1], [1, 0]], dtype=jnp.int32)

    layers, final = init_params(kp, dim, depth, heads, dim_head, mlp_dim)

    out = fusion_transformer(x, m_labels, layers, final,
                             seqLs=seqLs, heads=heads, dim_head=dim_head)
    out = jax.block_until_ready(out)

    ref = reference(x, m_labels, layers, final,
                    seqLs=seqLs, heads=heads, dim_head=dim_head)
    np.testing.assert_allclose(np.asarray(out), np.asarray(ref),
                               rtol=1e-4, atol=1e-4, equal_nan=True)

    print("KERNEL_OK")
</pallas_src>

<mosaic_0001>
module attributes {stable_mosaic.version = 11 : i64} {
  func.func @_fused_kernel(%arg0: i32, %arg1: i32, %arg2: memref<16x32xf32, #tpu.memory_space<vmem>>, %arg3: memref<2x8x1xf32, #tpu.memory_space<vmem>>, %arg4: memref<2x1x8xf32, #tpu.memory_space<vmem>>, %arg5: memref<1x9x64xf32, #tpu.memory_space<vmem>>, %arg6: memref<1x32x96xf32, #tpu.memory_space<vmem>>, %arg7: memref<1x32x32xf32, #tpu.memory_space<vmem>>, %arg8: memref<1x32x64xf32, #tpu.memory_space<vmem>>, %arg9: memref<1x64x32xf32, #tpu.memory_space<vmem>>, %arg10: memref<16x32xf32, #tpu.memory_space<vmem>>, %arg11: memref<16x32xf32, #tpu.memory_space<vmem>>, %arg12: memref<2x8x8xf32, #tpu.memory_space<vmem>>, %arg13: memref<16x32xf32, #tpu.memory_space<vmem>>) attributes {dimension_semantics = [#tpu.dimension_semantics<parallel>, #tpu.dimension_semantics<arbitrary>], iteration_bounds = array<i64: 1, 2>, scalar_prefetch = 0 : i64, scratch_operands = 3 : i64, tpu.core_type = #tpu.core_type<tc>, window_params = [{transform_indices = @transform_0, window_bounds = array<i64: 16, 32>}, {transform_indices = @transform_1, window_bounds = array<i64: 2, 8, 1>}, {transform_indices = @transform_2, window_bounds = array<i64: 2, 1, 8>}, {transform_indices = @transform_3, window_bounds = array<i64: 1, 9, 64>}, {transform_indices = @transform_4, window_bounds = array<i64: 1, 32, 96>}, {transform_indices = @transform_5, window_bounds = array<i64: 1, 32, 32>}, {transform_indices = @transform_6, window_bounds = array<i64: 1, 32, 64>}, {transform_indices = @transform_7, window_bounds = array<i64: 1, 64, 32>}, {transform_indices = @transform_8, window_bounds = array<i64: 16, 32>}]} {
    %c0_i32 = arith.constant 0 : i32
    %0 = arith.cmpi eq, %arg1, %c0_i32 : i32
    %1 = arith.extui %0 : i1 to i32
    %c0_i32_0 = arith.constant 0 : i32
    %2 = arith.cmpi ne, %1, %c0_i32_0 : i32
    scf.if %2 {
      %c0_62 = arith.constant 0 : index
      %c0_63 = arith.constant 0 : index
      %164 = vector.load %arg2[%c0_62, %c0_63] : memref<16x32xf32, #tpu.memory_space<vmem>>, vector<16x32xf32>
      %c0_64 = arith.constant 0 : index
      %c0_65 = arith.constant 0 : index
      %165 = vector.load %arg11[%c0_64, %c0_65] : memref<16x32xf32, #tpu.memory_space<vmem>>, vector<16x32xf32>
      tpu.vector_store %arg11[%c0_64, %c0_65], %164 {strides = array<i32>} : memref<16x32xf32, #tpu.memory_space<vmem>>, vector<16x32xf32>,
      %c0_66 = arith.constant 0 : index
      %c0_67 = arith.constant 0 : index
      %c0_68 = arith.constant 0 : index
      %166 = vector.load %arg3[%c0_66, %c0_67, %c0_68] : memref<2x8x1xf32, #tpu.memory_space<vmem>>, vector<2x8x1xf32>
      %c0_69 = arith.constant 0 : index
      %c0_70 = arith.constant 0 : index
      %c0_71 = arith.constant 0 : index
      %167 = vector.load %arg4[%c0_69, %c0_70, %c0_71] : memref<2x1x8xf32, #tpu.memory_space<vmem>>, vector<2x1x8xf32>
      %168 = vector.broadcast %166 : vector<2x8x1xf32> to vector<2x8x8xf32>
      %169 = vector.broadcast %167 : vector<2x1x8xf32> to vector<2x8x8xf32>
      %170 = arith.addf %168, %169 : vector<2x8x8xf32>
      %c0_72 = arith.constant 0 : index
      %c0_73 = arith.constant 0 : index
      %c0_74 = arith.constant 0 : index
      %171 = vector.load %arg12[%c0_72, %c0_73, %c0_74] : memref<2x8x8xf32, #tpu.memory_space<vmem>>, vector<2x8x8xf32>
      tpu.vector_store %arg12[%c0_72, %c0_73, %c0_74], %170 {strides = array<i32>} : memref<2x8x8xf32, #tpu.memory_space<vmem>>, vector<2x8x8xf32>,
    } else {
    }
    %c0 = arith.constant 0 : index
    %c0_1 = arith.constant 0 : index
    %c0_2 = arith.constant 0 : index
    %3 = vector.load %arg5[%c0, %c0_1, %c0_2] : memref<1x9x64xf32, #tpu.memory_space<vmem>>, vector<1x9x64xf32>
    %4 = vector.shape_cast %3 : vector<1x9x64xf32> to vector<9x64xf32>
    %5 = vector.extract_strided_slice %4 {offsets = [0, 0], sizes = [1, 32], strides = [1, 1]} : vector<9x64xf32> to vector<1x32xf32>
    %6 = vector.extract_strided_slice %4 {offsets = [1, 0], sizes = [1, 32], strides = [1, 1]} : vector<9x64xf32> to vector<1x32xf32>
    %7 = vector.extract_strided_slice %4 {offsets = [2, 0], sizes = [1, 32], strides = [1, 1]} : vector<9x64xf32> to vector<1x32xf32>
    %8 = vector.extract_strided_slice %4 {offsets = [3, 0], sizes = [1, 32], strides = [1, 1]} : vector<9x64xf32> to vector<1x32xf32>
    %9 = vector.extract_strided_slice %4 {offsets = [4, 0], sizes = [1, 32], strides = [1, 1]} : vector<9x64xf32> to vector<1x32xf32>
    %10 = vector.extract_strided_slice %4 {offsets = [5, 0], sizes = [1, 64], strides = [1, 1]} : vector<9x64xf32> to vector<1x64xf32>
    %11 = vector.extract_strided_slice %4 {offsets = [6, 0], sizes = [1, 32], strides = [1, 1]} : vector<9x64xf32> to vector<1x32xf32>
    %c0_3 = arith.constant 0 : index
    %c0_4 = arith.constant 0 : index
    %12 = vector.load %arg11[%c0_3, %c0_4] : memref<16x32xf32, #tpu.memory_space<vmem>>, vector<16x32xf32>
    %c0_5 = arith.constant 0 : index
    %c0_6 = arith.constant 0 : index
    %c0_7 = arith.constant 0 : index
    %13 = vector.load %arg12[%c0_5, %c0_6, %c0_7] : memref<2x8x8xf32, #tpu.memory_space<vmem>>, vector<2x8x8xf32>
    %cst = arith.constant dense<0.000000e+00> : vector<16xf32>
    %14 = vector.multi_reduction <add>, %12, %cst [1] : vector<16x32xf32> to vector<16xf32>
    %15 = vector.shape_cast %14 : vector<16xf32> to vector<16x1xf32>
    %cst_8 = arith.constant 3.200000e+01 : f32
    %16 = vector.broadcast %cst_8 : f32 to vector<16x1xf32>
    %17 = arith.divf %15, %16 : vector<16x1xf32>
    %18 = vector.broadcast %17 : vector<16x1xf32> to vector<16x32xf32>
    %19 = arith.subf %12, %18 : vector<16x32xf32>
    %20 = arith.mulf %19, %19 : vector<16x32xf32>
    %cst_9 = arith.constant dense<0.000000e+00> : vector<16xf32>
    %21 = vector.multi_reduction <add>, %20, %cst_9 [1] : vector<16x32xf32> to vector<16xf32>
    %22 = vector.shape_cast %21 : vector<16xf32> to vector<16x1xf32>
    %cst_10 = arith.constant 3.200000e+01 : f32
    %23 = vector.broadcast %cst_10 : f32 to vector<16x1xf32>
    %24 = arith.divf %22, %23 : vector<16x1xf32>
    %25 = vector.broadcast %17 : vector<16x1xf32> to vector<16x32xf32>
    %26 = arith.subf %12, %25 : vector<16x32xf32>
    %cst_11 = arith.constant 9.99999974E-6 : f32
    %27 = vector.broadcast %cst_11 : f32 to vector<16x1xf32>
    %28 = arith.addf %24, %27 : vector<16x1xf32>
    %29 = math.rsqrt %28 : vector<16x1xf32>
    %30 = vector.broadcast %29 : vector<16x1xf32> to vector<16x32xf32>
    %31 = arith.mulf %26, %30 : vector<16x32xf32>
    %32 = vector.broadcast %5 : vector<1x32xf32> to vector<16x32xf32>
    %33 = arith.mulf %31, %32 : vector<16x32xf32>
    %34 = vector.broadcast %6 : vector<1x32xf32> to vector<16x32xf32>
    %35 = arith.addf %33, %34 : vector<16x32xf32>
    %c0_12 = arith.constant 0 : index
    %c0_13 = arith.constant 0 : index
    %c0_14 = arith.constant 0 : index
    %36 = vector.load %arg6[%c0_12, %c0_13, %c0_14] : memref<1x32x96xf32, #tpu.memory_space<vmem>>, vector<1x32x96xf32>
    %37 = vector.shape_cast %36 : vector<1x32x96xf32> to vector<32x96xf32>
    %cst_15 = arith.constant dense<0.000000e+00> : vector<16x96xf32>
    %38 = tpu.matmul %35, %37, %cst_15 {dimension_numbers = #tpu.dot_dimension_numbers<[1], [0], [0], [1], [0, 0, 1, 1], [], []>} : vector<16x32xf32>, vector<32x96xf32>, vector<16x96xf32> -> vector<16x96xf32>
    %39 = vector.shape_cast %38 : vector<16x96xf32> to vector<2x8x96xf32>
    %40 = vector.extract_strided_slice %39 {offsets = [0, 0, 0], sizes = [2, 8, 8], strides = [1, 1, 1]} : vector<2x8x96xf32> to vector<2x8x8xf32>
    %41 = vector.extract_strided_slice %39 {offsets = [0, 0, 32], sizes = [2, 8, 8], strides = [1, 1, 1]} : vector<2x8x96xf32> to vector<2x8x8xf32>
    %42 = vector.extract_strided_slice %39 {offsets = [0, 0, 64], sizes = [2, 8, 8], strides = [1, 1, 1]} : vector<2x8x96xf32> to vector<2x8x8xf32>
    "tpu.trace_start"() <{level = 10 : i32, message = "bnd,bmd->bnm"}> : () -> ()
    %cst_16 = arith.constant dense<0.000000e+00> : vector<2x8x8xf32>
    %43 = tpu.matmul %40, %41, %cst_16 {dimension_numbers = #tpu.dot_dimension_numbers<[2], [2], [1], [1], [0, 0, 0, 1, 1, 1], [0], [0]>} : vector<2x8x8xf32>, vector<2x8x8xf32>, vector<2x8x8xf32> -> vector<2x8x8xf32>
    "tpu.trace_stop"() : () -> ()
    %44 = arith.addf %43, %13 : vector<2x8x8xf32>
    %cst_17 = arith.constant dense<0xFF800000> : vector<2x8xf32>
    %45 = vector.multi_reduction <maximumf>, %44, %cst_17 [2] : vector<2x8x8xf32> to vector<2x8xf32>
    %46 = vector.shape_cast %45 : vector<2x8xf32> to vector<2x8x1xf32>
    %47 = vector.broadcast %46 : vector<2x8x1xf32> to vector<2x8x8xf32>
    %48 = arith.subf %44, %47 : vector<2x8x8xf32>
    %49 = math.exp %48 : vector<2x8x8xf32>
    %cst_18 = arith.constant dense<0.000000e+00> : vector<2x8xf32>
    %50 = vector.multi_reduction <add>, %49, %cst_18 [2] : vector<2x8x8xf32> to vector<2x8xf32>
    %51 = vector.shape_cast %50 : vector<2x8xf32> to vector<2x8x1xf32>
    %52 = tpu.reciprocal %51 : vector<2x8x1xf32> -> vector<2x8x1xf32>
    %53 = vector.broadcast %52 : vector<2x8x1xf32> to vector<2x8x8xf32>
    %54 = arith.mulf %49, %53 : vector<2x8x8xf32>
    "tpu.trace_start"() <{level = 10 : i32, message = "bnm,bmd->bnd"}> : () -> ()
    %cst_19 = arith.constant dense<0.000000e+00> : vector<2x8x8xf32>
    %55 = tpu.matmul %54, %42, %cst_19 {dimension_numbers = #tpu.dot_dimension_numbers<[2], [1], [1], [2], [0, 0, 0, 1, 1, 2], [0], [0]>} : vector<2x8x8xf32>, vector<2x8x8xf32>, vector<2x8x8xf32> -> vector<2x8x8xf32>
    "tpu.trace_stop"() : () -> ()
    %56 = vector.shape_cast %55 : vector<2x8x8xf32> to vector<16x8xf32>
    %c0_20 = arith.constant 0 : index
    %c0_21 = arith.constant 0 : index
    %57 = vector.load %arg13[%c0_20, %c0_21] : memref<16x32xf32, #tpu.memory_space<vmem>>, vector<16x8xf32>
    tpu.vector_store %arg13[%c0_20, %c0_21], %56 {strides = array<i32>} : memref<16x32xf32, #tpu.memory_space<vmem>>, vector<16x8xf32>,
    %58 = vector.extract_strided_slice %39 {offsets = [0, 0, 8], sizes = [2, 8, 8], strides = [1, 1, 1]} : vector<2x8x96xf32> to vector<2x8x8xf32>
    %59 = vector.extract_strided_slice %39 {offsets = [0, 0, 40], sizes = [2, 8, 8], strides = [1, 1, 1]} : vector<2x8x96xf32> to vector<2x8x8xf32>
    %60 = vector.extract_strided_slice %39 {offsets = [0, 0, 72], sizes = [2, 8, 8], strides = [1, 1, 1]} : vector<2x8x96xf32> to vector<2x8x8xf32>
    "tpu.trace_start"() <{level = 10 : i32, message = "bnd,bmd->bnm"}> : () -> ()
    %cst_22 = arith.constant dense<0.000000e+00> : vector<2x8x8xf32>
    %61 = tpu.matmul %58, %59, %cst_22 {dimension_numbers = #tpu.dot_dimension_numbers<[2], [2], [1], [1], [0, 0, 0, 1, 1, 1], [0], [0]>} : vector<2x8x8xf32>, vector<2x8x8xf32>, vector<2x8x8xf32> -> vector<2x8x8xf32>
    "tpu.trace_stop"() : () -> ()
    %62 = arith.addf %61, %13 : vector<2x8x8xf32>
    %cst_23 = arith.constant dense<0xFF800000> : vector<2x8xf32>
    %63 = vector.multi_reduction <maximumf>, %62, %cst_23 [2] : vector<2x8x8xf32> to vector<2x8xf32>
    %64 = vector.shape_cast %63 : vector<2x8xf32> to vector<2x8x1xf32>
    %65 = vector.broadcast %64 : vector<2x8x1xf32> to vector<2x8x8xf32>
    %66 = arith.subf %62, %65 : vector<2x8x8xf32>
    %67 = math.exp %66 : vector<2x8x8xf32>
    %cst_24 = arith.constant dense<0.000000e+00> : vector<2x8xf32>
    %68 = vector.multi_reduction <add>, %67, %cst_24 [2] : vector<2x8x8xf32> to vector<2x8xf32>
    %69 = vector.shape_cast %68 : vector<2x8xf32> to vector<2x8x1xf32>
    %70 = tpu.reciprocal %69 : vector<2x8x1xf32> -> vector<2x8x1xf32>
    %71 = vector.broadcast %70 : vector<2x8x1xf32> to vector<2x8x8xf32>
    %72 = arith.mulf %67, %71 : vector<2x8x8xf32>
    "tpu.trace_start"() <{level = 10 : i32, message = "bnm,bmd->bnd"}> : () -> ()
    %cst_25 = arith.constant dense<0.000000e+00> : vector<2x8x8xf32>
    %73 = tpu.matmul %72, %60, %cst_25 {dimension_numbers = #tpu.dot_dimension_numbers<[2], [1], [1], [2], [0, 0, 0, 1, 1, 2], [0], [0]>} : vector<2x8x8xf32>, vector<2x8x8xf32>, vector<2x8x8xf32> -> vector<2x8x8xf32>
    "tpu.trace_stop"() : () -> ()
    %74 = vector.shape_cast %73 : vector<2x8x8xf32> to vector<16x8xf32>
    %c0_26 = arith.constant 0 : index
    %c8 = arith.constant 8 : index
    %75 = vector.load %arg13[%c0_26, %c8] : memref<16x32xf32, #tpu.memory_space<vmem>>, vector<16x8xf32>
    tpu.vector_store %arg13[%c0_26, %c8], %74 {strides = array<i32>} : memref<16x32xf32, #tpu.memory_space<vmem>>, vector<16x8xf32>,
    %76 = vector.extract_strided_slice %39 {offsets = [0, 0, 16], sizes = [2, 8, 8], strides = [1, 1, 1]} : vector<2x8x96xf32> to vector<2x8x8xf32>
    %77 = vector.extract_strided_slice %39 {offsets = [0, 0, 48], sizes = [2, 8, 8], strides = [1, 1, 1]} : vector<2x8x96xf32> to vector<2x8x8xf32>
    %78 = vector.extract_strided_slice %39 {offsets = [0, 0, 80], sizes = [2, 8, 8], strides = [1, 1, 1]} : vector<2x8x96xf32> to vector<2x8x8xf32>
    "tpu.trace_start"() <{level = 10 : i32, message = "bnd,bmd->bnm"}> : () -> ()
    %cst_27 = arith.constant dense<0.000000e+00> : vector<2x8x8xf32>
    %79 = tpu.matmul %76, %77, %cst_27 {dimension_numbers = #tpu.dot_dimension_numbers<[2], [2], [1], [1], [0, 0, 0, 1, 1, 1], [0], [0]>} : vector<2x8x8xf32>, vector<2x8x8xf32>, vector<2x8x8xf32> -> vector<2x8x8xf32>
    "tpu.trace_stop"() : () -> ()
    %80 = arith.addf %79, %13 : vector<2x8x8xf32>
    %cst_28 = arith.constant dense<0xFF800000> : vector<2x8xf32>
    %81 = vector.multi_reduction <maximumf>, %80, %cst_28 [2] : vector<2x8x8xf32> to vector<2x8xf32>
    %82 = vector.shape_cast %81 : vector<2x8xf32> to vector<2x8x1xf32>
    %83 = vector.broadcast %82 : vector<2x8x1xf32> to vector<2x8x8xf32>
    %84 = arith.subf %80, %83 : vector<2x8x8xf32>
    %85 = math.exp %84 : vector<2x8x8xf32>
    %cst_29 = arith.constant dense<0.000000e+00> : vector<2x8xf32>
    %86 = vector.multi_reduction <add>, %85, %cst_29 [2] : vector<2x8x8xf32> to vector<2x8xf32>
    %87 = vector.shape_cast %86 : vector<2x8xf32> to vector<2x8x1xf32>
    %88 = tpu.reciprocal %87 : vector<2x8x1xf32> -> vector<2x8x1xf32>
    %89 = vector.broadcast %88 : vector<2x8x1xf32> to vector<2x8x8xf32>
    %90 = arith.mulf %85, %89 : vector<2x8x8xf32>
    "tpu.trace_start"() <{level = 10 : i32, message = "bnm,bmd->bnd"}> : () -> ()
    %cst_30 = arith.constant dense<0.000000e+00> : vector<2x8x8xf32>
    %91 = tpu.matmul %90, %78, %cst_30 {dimension_numbers = #tpu.dot_dimension_numbers<[2], [1], [1], [2], [0, 0, 0, 1, 1, 2], [0], [0]>} : vector<2x8x8xf32>, vector<2x8x8xf32>, vector<2x8x8xf32> -> vector<2x8x8xf32>
    "tpu.trace_stop"() : () -> ()
    %92 = vector.shape_cast %91 : vector<2x8x8xf32> to vector<16x8xf32>
    %c0_31 = arith.constant 0 : index
    %c16 = arith.constant 16 : index
    %93 = vector.load %arg13[%c0_31, %c16] : memref<16x32xf32, #tpu.memory_space<vmem>>, vector<16x8xf32>
    tpu.vector_store %arg13[%c0_31, %c16], %92 {strides = array<i32>} : memref<16x32xf32, #tpu.memory_space<vmem>>, vector<16x8xf32>,
    %94 = vector.extract_strided_slice %39 {offsets = [0, 0, 24], sizes = [2, 8, 8], strides = [1, 1, 1]} : vector<2x8x96xf32> to vector<2x8x8xf32>
    %95 = vector.extract_strided_slice %39 {offsets = [0, 0, 56], sizes = [2, 8, 8], strides = [1, 1, 1]} : vector<2x8x96xf32> to vector<2x8x8xf32>
    %96 = vector.extract_strided_slice %39 {offsets = [0, 0, 88], sizes = [2, 8, 8], strides = [1, 1, 1]} : vector<2x8x96xf32> to vector<2x8x8xf32>
    "tpu.trace_start"() <{level = 10 : i32, message = "bnd,bmd->bnm"}> : () -> ()
    %cst_32 = arith.constant dense<0.000000e+00> : vector<2x8x8xf32>
    %97 = tpu.matmul %94, %95, %cst_32 {dimension_numbers = #tpu.dot_dimension_numbers<[2], [2], [1], [1], [0, 0, 0, 1, 1, 1], [0], [0]>} : vector<2x8x8xf32>, vector<2x8x8xf32>, vector<2x8x8xf32> -> vector<2x8x8xf32>
    "tpu.trace_stop"() : () -> ()
    %98 = arith.addf %97, %13 : vector<2x8x8xf32>
    %cst_33 = arith.constant dense<0xFF800000> : vector<2x8xf32>
    %99 = vector.multi_reduction <maximumf>, %98, %cst_33 [2] : vector<2x8x8xf32> to vector<2x8xf32>
    %100 = vector.shape_cast %99 : vector<2x8xf32> to vector<2x8x1xf32>
    %101 = vector.broadcast %100 : vector<2x8x1xf32> to vector<2x8x8xf32>
    %102 = arith.subf %98, %101 : vector<2x8x8xf32>
    %103 = math.exp %102 : vector<2x8x8xf32>
    %cst_34 = arith.constant dense<0.000000e+00> : vector<2x8xf32>
    %104 = vector.multi_reduction <add>, %103, %cst_34 [2] : vector<2x8x8xf32> to vector<2x8xf32>
    %105 = vector.shape_cast %104 : vector<2x8xf32> to vector<2x8x1xf32>
    %106 = tpu.reciprocal %105 : vector<2x8x1xf32> -> vector<2x8x1xf32>
    %107 = vector.broadcast %106 : vector<2x8x1xf32> to vector<2x8x8xf32>
    %108 = arith.mulf %103, %107 : vector<2x8x8xf32>
    "tpu.trace_start"() <{level = 10 : i32, message = "bnm,bmd->bnd"}> : () -> ()
    %cst_35 = arith.constant dense<0.000000e+00> : vector<2x8x8xf32>
    %109 = tpu.matmul %108, %96, %cst_35 {dimension_numbers = #tpu.dot_dimension_numbers<[2], [1], [1], [2], [0, 0, 0, 1, 1, 2], [0], [0]>} : vector<2x8x8xf32>, vector<2x8x8xf32>, vector<2x8x8xf32> -> vector<2x8x8xf32>
    "tpu.trace_stop"() : () -> ()
    %110 = vector.shape_cast %109 : vector<2x8x8xf32> to vector<16x8xf32>
    %c0_36 = arith.constant 0 : index
    %c24 = arith.constant 24 : index
    %111 = vector.load %arg13[%c0_36, %c24] : memref<16x32xf32, #tpu.memory_space<vmem>>, vector<16x8xf32>
    tpu.vector_store %arg13[%c0_36, %c24], %110 {strides = array<i32>} : memref<16x32xf32, #tpu.memory_space<vmem>>, vector<16x8xf32>,
    %c0_37 = arith.constant 0 : index
    %c0_38 = arith.constant 0 : index
    %112 = vector.load %arg13[%c0_37, %c0_38] : memref<16x32xf32, #tpu.memory_space<vmem>>, vector<16x32xf32>
    %c0_39 = arith.constant 0 : index
    %c0_40 = arith.constant 0 : index
    %c0_41 = arith.constant 0 : index
    %113 = vector.load %arg7[%c0_39, %c0_40, %c0_41] : memref<1x32x32xf32, #tpu.memory_space<vmem>>, vector<1x32x32xf32>
    %114 = vector.shape_cast %113 : vector<1x32x32xf32> to vector<32x32xf32>
    %cst_42 = arith.constant dense<0.000000e+00> : vector<16x32xf32>
    %115 = tpu.matmul %112, %114, %cst_42 {dimension_numbers = #tpu.dot_dimension_numbers<[1], [0], [0], [1], [0, 0, 1, 1], [], []>} : vector<16x32xf32>, vector<32x32xf32>, vector<16x32xf32> -> vector<16x32xf32>
    %116 = vector.broadcast %7 : vector<1x32xf32> to vector<16x32xf32>
    %117 = arith.addf %115, %116 : vector<16x32xf32>
    %118 = arith.addf %117, %12 : vector<16x32xf32>
    %cst_43 = arith.constant dense<0.000000e+00> : vector<16xf32>
    %119 = vector.multi_reduction <add>, %118, %cst_43 [1] : vector<16x32xf32> to vector<16xf32>
    %120 = vector.shape_cast %119 : vector<16xf32> to vector<16x1xf32>
    %cst_44 = arith.constant 3.200000e+01 : f32
    %121 = vector.broadcast %cst_44 : f32 to vector<16x1xf32>
    %122 = arith.divf %120, %121 : vector<16x1xf32>
    %123 = vector.broadcast %122 : vector<16x1xf32> to vector<16x32xf32>
    %124 = arith.subf %118, %123 : vector<16x32xf32>
    %125 = arith.mulf %124, %124 : vector<16x32xf32>
    %cst_45 = arith.constant dense<0.000000e+00> : vector<16xf32>
    %126 = vector.multi_reduction <add>, %125, %cst_45 [1] : vector<16x32xf32> to vector<16xf32>
    %127 = vector.shape_cast %126 : vector<16xf32> to vector<16x1xf32>
    %cst_46 = arith.constant 3.200000e+01 : f32
    %128 = vector.broadcast %cst_46 : f32 to vector<16x1xf32>
    %129 = arith.divf %127, %128 : vector<16x1xf32>
    %130 = vector.broadcast %122 : vector<16x1xf32> to vector<16x32xf32>
    %131 = arith.subf %118, %130 : vector<16x32xf32>
    %cst_47 = arith.constant 9.99999974E-6 : f32
    %132 = vector.broadcast %cst_47 : f32 to vector<16x1xf32>
    %133 = arith.addf %129, %132 : vector<16x1xf32>
    %134 = math.rsqrt %133 : vector<16x1xf32>
    %135 = vector.broadcast %134 : vector<16x1xf32> to vector<16x32xf32>
    %136 = arith.mulf %131, %135 : vector<16x32xf32>
    %137 = vector.broadcast %8 : vector<1x32xf32> to vector<16x32xf32>
    %138 = arith.mulf %136, %137 : vector<16x32xf32>
    %139 = vector.broadcast %9 : vector<1x32xf32> to vector<16x32xf32>
    %140 = arith.addf %138, %139 : vector<16x32xf32>
    %c0_48 = arith.constant 0 : index
    %c0_49 = arith.constant 0 : index
    %c0_50 = arith.constant 0 : index
    %141 = vector.load %arg8[%c0_48, %c0_49, %c0_50] : memref<1x32x64xf32, #tpu.memory_space<vmem>>, vector<1x32x64xf32>
    %142 = vector.shape_cast %141 : vector<1x32x64xf32> to vector<32x64xf32>
    %cst_51 = arith.constant dense<0.000000e+00> : vector<16x64xf32>
    %143 = tpu.matmul %140, %142, %cst_51 {dimension_numbers = #tpu.dot_dimension_numbers<[1], [0], [0], [1], [0, 0, 1, 1], [], []>} : vector<16x32xf32>, vector<32x64xf32>, vector<16x64xf32> -> vector<16x64xf32>
    %144 = vector.broadcast %10 : vector<1x64xf32> to vector<16x64xf32>
    %145 = arith.addf %143, %144 : vector<16x64xf32>
    %cst_52 = arith.constant 5.000000e-01 : f32
    %146 = vector.broadcast %cst_52 : f32 to vector<16x64xf32>
    %147 = arith.mulf %146, %145 : vector<16x64xf32>
    %cst_53 = arith.constant 0.707106769 : f32
    %148 = vector.broadcast %cst_53 : f32 to vector<16x64xf32>
    %149 = arith.mulf %145, %148 : vector<16x64xf32>
    %150 = math.erf %149 : vector<16x64xf32>
    %cst_54 = arith.constant 1.000000e+00 : f32
    %151 = vector.broadcast %cst_54 : f32 to vector<16x64xf32>
    %152 = arith.addf %151, %150 : vector<16x64xf32>
    %153 = arith.mulf %147, %152 : vector<16x64xf32>
    %c0_55 = arith.constant 0 : index
    %c0_56 = arith.constant 0 : index
    %c0_57 = arith.constant 0 : index
    %154 = vector.load %arg9[%c0_55, %c0_56, %c0_57] : memref<1x64x32xf32, #tpu.memory_space<vmem>>, vector<1x64x32xf32>
    %155 = vector.shape_cast %154 : vector<1x64x32xf32> to vector<64x32xf32>
    %cst_58 = arith.constant dense<0.000000e+00> : vector<16x32xf32>
    %156 = tpu.matmul %153, %155, %cst_58 {dimension_numbers = #tpu.dot_dimension_numbers<[1], [0], [0], [1], [0, 0, 1, 1], [], []>} : vector<16x64xf32>, vector<64x32xf32>, vector<16x32xf32> -> vector<16x32xf32>
    %157 = vector.broadcast %11 : vector<1x32xf32> to vector<16x32xf32>
    %158 = arith.addf %156, %157 : vector<16x32xf32>
    %159 = arith.addf %158, %118 : vector<16x32xf32>
    %c0_59 = arith.constant 0 : index
    %c0_60 = arith.constant 0 : index
    %160 = vector.load %arg11[%c0_59, %c0_60] : memref<16x32xf32, #tpu.memory_space<vmem>>, vector<16x32xf32>
    tpu.vector_store %arg11[%c0_59, %c0_60], %159 {strides = array<i32>} : memref<16x32xf32, #tpu.memory_space<vmem>>, vector<16x32xf32>,
    %c1_i32 = arith.constant 1 : i32
    %161 = arith.cmpi eq, %arg1, %c1_i32 : i32
    %162 = arith.extui %161 : i1 to i32
    %c0_i32_61 = arith.constant 0 : i32
    %163 = arith.cmpi ne, %162, %c0_i32_61 : i32
    scf.if %163 {
      %164 = vector.extract_strided_slice %4 {offsets = [7, 0], sizes = [1, 32], strides = [1, 1]} : vector<9x64xf32> to vector<1x32xf32>
      %165 = vector.extract_strided_slice %4 {offsets = [8, 0], sizes = [1, 32], strides = [1, 1]} : vector<9x64xf32> to vector<1x32xf32>
      %cst_62 = arith.constant dense<0.000000e+00> : vector<16xf32>
      %166 = vector.multi_reduction <add>, %159, %cst_62 [1] : vector<16x32xf32> to vector<16xf32>
      %167 = vector.shape_cast %166 : vector<16xf32> to vector<16x1xf32>
      %cst_63 = arith.constant 3.200000e+01 : f32
      %168 = vector.broadcast %cst_63 : f32 to vector<16x1xf32>
      %169 = arith.divf %167, %168 : vector<16x1xf32>
      %170 = vector.broadcast %169 : vector<16x1xf32> to vector<16x32xf32>
      %171 = arith.subf %159, %170 : vector<16x32xf32>
      %172 = arith.mulf %171, %171 : vector<16x32xf32>
      %cst_64 = arith.constant dense<0.000000e+00> : vector<16xf32>
      %173 = vector.multi_reduction <add>, %172, %cst_64 [1] : vector<16x32xf32> to vector<16xf32>
      %174 = vector.shape_cast %173 : vector<16xf32> to vector<16x1xf32>
      %cst_65 = arith.constant 3.200000e+01 : f32
      %175 = vector.broadcast %cst_65 : f32 to vector<16x1xf32>
      %176 = arith.divf %174, %175 : vector<16x1xf32>
      %177 = vector.broadcast %169 : vector<16x1xf32> to vector<16x32xf32>
      %178 = arith.subf %159, %177 : vector<16x32xf32>
      %cst_66 = arith.constant 9.99999974E-6 : f32
      %179 = vector.broadcast %cst_66 : f32 to vector<16x1xf32>
      %180 = arith.addf %176, %179 : vector<16x1xf32>
      %181 = math.rsqrt %180 : vector<16x1xf32>
      %182 = vector.broadcast %181 : vector<16x1xf32> to vector<16x32xf32>
      %183 = arith.mulf %178, %182 : vector<16x32xf32>
      %184 = vector.broadcast %164 : vector<1x32xf32> to vector<16x32xf32>
      %185 = arith.mulf %183, %184 : vector<16x32xf32>
      %186 = vector.broadcast %165 : vector<1x32xf32> to vector<16x32xf32>
      %187 = arith.addf %185, %186 : vector<16x32xf32>
      %c0_67 = arith.constant 0 : index
      %c0_68 = arith.constant 0 : index
      %188 = vector.load %arg10[%c0_67, %c0_68] : memref<16x32xf32, #tpu.memory_space<vmem>>, vector<16x32xf32>
      tpu.vector_store %arg10[%c0_67, %c0_68], %187 {strides = array<i32>} : memref<16x32xf32, #tpu.memory_space<vmem>>, vector<16x32xf32>,
    } else {
    }
    return
  }
  func.func @transform_0(%arg0: i32, %arg1: i32) -> (i32, i32) {
    %c0_i32 = arith.constant 0 : i32
    %c0_i32_0 = arith.constant 0 : i32
    return %arg0, %c0_i32 : i32, i32
  }
  func.func @transform_1(%arg0: i32, %arg1: i32) -> (i32, i32, i32) {
    %c0_i32 = arith.constant 0 : i32
    %c0_i32_0 = arith.constant 0 : i32
    %c0_i32_1 = arith.constant 0 : i32
    return %arg0, %c0_i32, %c0_i32_0 : i32, i32, i32
  }
  func.func @transform_2(%arg0: i32, %arg1: i32) -> (i32, i32, i32) {
    %c0_i32 = arith.constant 0 : i32
    %c0_i32_0 = arith.constant 0 : i32
    %c0_i32_1 = arith.constant 0 : i32
    return %arg0, %c0_i32, %c0_i32_0 : i32, i32, i32
  }
  func.func @transform_3(%arg0: i32, %arg1: i32) -> (i32, i32, i32) {
    %c0_i32 = arith.constant 0 : i32
    %c0_i32_0 = arith.constant 0 : i32
    %c0_i32_1 = arith.constant 0 : i32
    return %arg1, %c0_i32, %c0_i32_0 : i32, i32, i32
  }
  func.func @transform_4(%arg0: i32, %arg1: i32) -> (i32, i32, i32) {
    %c0_i32 = arith.constant 0 : i32
    %c0_i32_0 = arith.constant 0 : i32
    %c0_i32_1 = arith.constant 0 : i32
    return %arg1, %c0_i32, %c0_i32_0 : i32, i32, i32
  }
  func.func @transform_5(%arg0: i32, %arg1: i32) -> (i32, i32, i32) {
    %c0_i32 = arith.constant 0 : i32
    %c0_i32_0 = arith.constant 0 : i32
    %c0_i32_1 = arith.constant 0 : i32
    return %arg1, %c0_i32, %c0_i32_0 : i32, i32, i32
  }
  func.func @transform_6(%arg0: i32, %arg1: i32) -> (i32, i32, i32) {
    %c0_i32 = arith.constant 0 : i32
    %c0_i32_0 = arith.constant 0 : i32
    %c0_i32_1 = arith.constant 0 : i32
    return %arg1, %c0_i32, %c0_i32_0 : i32, i32, i32
  }
  func.func @transform_7(%arg0: i32, %arg1: i32) -> (i32, i32, i32) {
    %c0_i32 = arith.constant 0 : i32
    %c0_i32_0 = arith.constant 0 : i32
    %c0_i32_1 = arith.constant 0 : i32
    return %arg1, %c0_i32, %c0_i32_0 : i32, i32, i32
  }
  func.func @transform_8(%arg0: i32, %arg1: i32) -> (i32, i32) {
    %c0_i32 = arith.constant 0 : i32
    %c0_i32_0 = arith.constant 0 : i32
    return %arg0, %c0_i32 : i32, i32
  }
}

</mosaic_0001>

<llo_original>
// kernel: tpu_custom_call.1
$region0: #{tpu_custom_call.1}
  #allocation0 [shape = 'u32[]', space=smem, size = 0x4, offset = 0x4, fixed_abs, tag = 'smem constant byte address 0x4 - core index']
  #allocation1 [shape = 'u32[72,128]{1,0:T(1,128)}', space=vmem, size = 0x9000, scoped, tag = 'internal scratch']
  #allocation2 [shape = 'f32[16,32]{1,0:T(8,128)}', space=vmem, size = 0x2000, scoped, tag = 'scratch operand']
  #allocation3 [shape = 'f32[2,8,8]{2,1,0:T(8,128)}', space=vmem, size = 0x2000, scoped, tag = 'scratch operand']
  #allocation4 [shape = 'f32[16,32]{1,0:T(8,128)}', space=vmem, size = 0x2000, scoped, tag = 'scratch operand']
  %s0 = inlined_call_operand.hbm [shape: f32[16,32], index: 0, kind: input, shape index: {}]
  %s1 = inlined_call_operand.vmem [shape: f32[2,8,1], index: 1, kind: input, shape index: {}]
  %s2 = inlined_call_operand.vmem [shape: f32[2,1,8], index: 2, kind: input, shape index: {}]
  %s3 = inlined_call_operand.vmem [shape: f32[2,9,64], index: 3, kind: input, shape index: {}]
  %s4 = inlined_call_operand.vmem [shape: f32[2,32,96], index: 4, kind: input, shape index: {}]
  %s5 = inlined_call_operand.vmem [shape: f32[2,32,32], index: 5, kind: input, shape index: {}]
  %s6 = inlined_call_operand.vmem [shape: f32[2,32,64], index: 6, kind: input, shape index: {}]
  %s7 = inlined_call_operand.vmem [shape: f32[2,64,32], index: 7, kind: input, shape index: {}]
  %s8 = inlined_call_operand.hbm [shape: f32[16,32], index: 8, kind: output, shape index: {}]
  %s9 = sld [smem:[#allocation0]]
  $region77: #{tpu_custom_call.1} parent=0
    _
  %s11 = ssub.s32 1, %s9
  %s12 = scalar_select 0, %s11, %s9
  $region1: #{tpu_custom_call.1} parent=0
    #allocation5 [shape = 'u8[8192]{0}', space=vmem, size = 0x2000, scoped, tag = 'input window, operand 0, single buffered']
    #allocation6 [shape = 's32[2]{0}', space=sflag, size = 0x8, scoped, tag = 'scoped memory for tpu_custom_call.1']
    #allocation7 [shape = 's32[2]{0}', space=sflag, size = 0x8, scoped, tag = 'scoped memory for tpu_custom_call.1']
    #allocation8 [shape = 'u8[8192]{0}', space=vmem, size = 0x2000, scoped, tag = 'output window, operand 0, single buffered']
    %13 = vsyncpa [#allocation6], 0
    %14 = vsyncpa [#allocation7], 0
    loop: start=0, step=1, limit=4
    $region2: #{tpu_custom_call.1} parent=1 // loop_pre_header
      _
    $region3: #{tpu_custom_call.1} parent=1 // loop_header
      %s16 = sphi 0, %s20
      %p17 = scmp.ge.s32.totalorder %s16, 4
      %s23 = sphi 0, %s35
      %s24 = sphi 0, %s31
      %s25 = sphi 0, %s23
      %s26 = sphi 0, %s24
      %s27 = sphi 0, %s25
      %s28 = sphi 0, %s26
      %s38 = sphi 0, %s40
      %s41 = sphi 0, %s38
      %s42 = sphi 0, %s41
      %s58 = sphi 0, %s42
      %s64 = sphi 0, %s66
      %s67 = sphi 0, %s64
      %s68 = sphi 0, %s67
      %s84 = sphi 0, %s68
      %s90 = sphi 0, %s92
      %s93 = sphi 0, %s90
      %s94 = sphi 0, %s93
      %s110 = sphi 0, %s94
      %s116 = sphi 0, %s118
      %s119 = sphi 0, %s116
      %s120 = sphi 0, %s119
      %s136 = sphi 0, %s120
      %s142 = sphi 0, %s144
      %s145 = sphi 0, %s142
      %s146 = sphi 0, %s145
      %s162 = sphi 0, %s146
      %s168 = sphi 0, %s170
      %s171 = sphi 0, %s168
      %s172 = sphi 0, %s171
      %s188 = sphi 0, %s172
      %s194 = sphi 0, %s196
      %s197 = sphi 0, %s194
      %s198 = sphi 0, %s197
      %s214 = sphi 0, %s198
      %s220 = sphi 0, %s222
      %s223 = sphi 0, %s220
      %s224 = sphi 0, %s223
      %s240 = sphi 0, %s224
      %s246 = sphi 0, %s248
      %s249 = sphi 0, %s246
      %s250 = sphi 0, %s249
      %s266 = sphi 0, %s250
    $region4: #{tpu_custom_call.1} parent=1 // loop_header_branch
      %19 = sbr.rel (%p17) target = $region8
    $region5: #{tpu_custom_call.1} parent=1 // loop_body
      %s21 = ssub.s32 %s16, 1
      %s22 = ssub.s32 %s16, 2
      %s29 = sadd.s32 1, %s24
      %p30 = scmp.ge.s32.totalorder %s29, 2
      %s31 = scalar_select %p30, 0, %s29
      %s32 = sadd.s32 1, %s23
      %s33 = scalar_select %p30, %s32, %s23
      %p34 = scmp.ge.s32.totalorder %s33, 1
      %s35 = scalar_select %p34, 0, %s33
      %s36 = ssub.s32 %s23, %s35
      %p37 = scmp.eq.s32.totalorder %s36, 0
      %s39 = sadd.s32 %s38, 1
      %s40 = scalar_select %p37, %s38, %s39
      %p43 = pneg %p37
      %p44 = scmp.eq.s32.totalorder %s16, 1
      %p45 = por %p43, %p44
      %p46 = scmp.ne.s32.totalorder %s38, %s41
      %p47 = scmp.eq.s32.totalorder %s16, 0
      %p48 = por %p46, %p47
      %p49 = scmp.ne.s32.totalorder %s38, %s41
      %p50 = scmp.eq.s32.totalorder %s21, 1
      %p51 = por %p49, %p50
      %p52 = scmp.ne.s32.totalorder %s41, %s42
      %p53 = scmp.eq.s32.totalorder %s21, 0
      %p54 = por %p52, %p53
      %p55 = scmp.ne.s32.totalorder %s41, %s42
      %p56 = scmp.eq.s32.totalorder %s22, 1
      %p57 = por %p55, %p56
      %p59 = scmp.ne.s32.totalorder %s42, %s58
      %p60 = scmp.eq.s32.totalorder %s22, 0
      %p61 = por %p59, %p60
      %s62 = ssub.s32 %s23, %s35
      %p63 = scmp.eq.s32.totalorder %s62, 0
      %s65 = sadd.s32 %s64, 1
      %s66 = scalar_select %p63, %s64, %s65
      %p69 = pneg %p63
      %p70 = scmp.eq.s32.totalorder %s16, 1
      %p71 = por %p69, %p70
      %p72 = scmp.ne.s32.totalorder %s64, %s67
      %p73 = scmp.eq.s32.totalorder %s16, 0
      %p74 = por %p72, %p73
      %p75 = scmp.ne.s32.totalorder %s64, %s67
      %p76 = scmp.eq.s32.totalorder %s21, 1
      %p77 = por %p75, %p76
      %p78 = scmp.ne.s32.totalorder %s67, %s68
      %p79 = scmp.eq.s32.totalorder %s21, 0
      %p80 = por %p78, %p79
      %p81 = scmp.ne.s32.totalorder %s67, %s68
      %p82 = scmp.eq.s32.totalorder %s22, 1
      %p83 = por %p81, %p82
      %p85 = scmp.ne.s32.totalorder %s68, %s84
      %p86 = scmp.eq.s32.totalorder %s22, 0
      %p87 = por %p85, %p86
      %s88 = ssub.s32 %s23, %s35
      %p89 = scmp.eq.s32.totalorder %s88, 0
      %s91 = sadd.s32 %s90, 1
      %s92 = scalar_select %p89, %s90, %s91
      %p95 = pneg %p89
      %p96 = scmp.eq.s32.totalorder %s16, 1
      %p97 = por %p95, %p96
      %p98 = scmp.ne.s32.totalorder %s90, %s93
      %p99 = scmp.eq.s32.totalorder %s16, 0
      %p100 = por %p98, %p99
      %p101 = scmp.ne.s32.totalorder %s90, %s93
      %p102 = scmp.eq.s32.totalorder %s21, 1
      %p103 = por %p101, %p102
      %p104 = scmp.ne.s32.totalorder %s93, %s94
      %p105 = scmp.eq.s32.totalorder %s21, 0
      %p106 = por %p104, %p105
      %p107 = scmp.ne.s32.totalorder %s93, %s94
      %p108 = scmp.eq.s32.totalorder %s22, 1
      %p109 = por %p107, %p108
      %p111 = scmp.ne.s32.totalorder %s94, %s110
      %p112 = scmp.eq.s32.totalorder %s22, 0
      %p113 = por %p111, %p112
      %s114 = ssub.s32 %s24, %s31
      %p115 = scmp.eq.s32.totalorder %s114, 0
      %s117 = sadd.s32 %s116, 1
      %s118 = scalar_select %p115, %s116, %s117
      %p121 = pneg %p115
      %p122 = scmp.eq.s32.totalorder %s16, 1
      %p123 = por %p121, %p122
      %p124 = scmp.ne.s32.totalorder %s116, %s119
      %p125 = scmp.eq.s32.totalorder %s16, 0
      %p126 = por %p124, %p125
      %p127 = scmp.ne.s32.totalorder %s116, %s119
      %p128 = scmp.eq.s32.totalorder %s21, 1
      %p129 = por %p127, %p128
      %p130 = scmp.ne.s32.totalorder %s119, %s120
      %p131 = scmp.eq.s32.totalorder %s21, 0
      %p132 = por %p130, %p131
      %p133 = scmp.ne.s32.totalorder %s119, %s120
      %p134 = scmp.eq.s32.totalorder %s22, 1
      %p135 = por %p133, %p134
      %p137 = scmp.ne.s32.totalorder %s120, %s136
      %p138 = scmp.eq.s32.totalorder %s22, 0
      %p139 = por %p137, %p138
      %s140 = ssub.s32 %s24, %s31
      %p141 = scmp.eq.s32.totalorder %s140, 0
      %s143 = sadd.s32 %s142, 1
      %s144 = scalar_select %p141, %s142, %s143
      %p147 = pneg %p141
      %p148 = scmp.eq.s32.totalorder %s16, 1
      %p149 = por %p147, %p148
      %p150 = scmp.ne.s32.totalorder %s142, %s145
      %p151 = scmp.eq.s32.totalorder %s16, 0
      %p152 = por %p150, %p151
      %p153 = scmp.ne.s32.totalorder %s142, %s145
      %p154 = scmp.eq.s32.totalorder %s21, 1
      %p155 = por %p153, %p154
      %p156 = scmp.ne.s32.totalorder %s145, %s146
      %p157 = scmp.eq.s32.totalorder %s21, 0
      %p158 = por %p156, %p157
      %p159 = scmp.ne.s32.totalorder %s145, %s146
      %p160 = scmp.eq.s32.totalorder %s22, 1
      %p161 = por %p159, %p160
      %p163 = scmp.ne.s32.totalorder %s146, %s162
      %p164 = scmp.eq.s32.totalorder %s22, 0
      %p165 = por %p163, %p164
      %s166 = ssub.s32 %s24, %s31
      %p167 = scmp.eq.s32.totalorder %s166, 0
      %s169 = sadd.s32 %s168, 1
      %s170 = scalar_select %p167, %s168, %s169
      %p173 = pneg %p167
      %p174 = scmp.eq.s32.totalorder %s16, 1
      %p175 = por %p173, %p174
      %p176 = scmp.ne.s32.totalorder %s168, %s171
      %p177 = scmp.eq.s32.totalorder %s16, 0
      %p178 = por %p176, %p177
      %p179 = scmp.ne.s32.totalorder %s168, %s171
      %p180 = scmp.eq.s32.totalorder %s21, 1
      %p181 = por %p179, %p180
      %p182 = scmp.ne.s32.totalorder %s171, %s172
      %p183 = scmp.eq.s32.totalorder %s21, 0
      %p184 = por %p182, %p183
      %p185 = scmp.ne.s32.totalorder %s171, %s172
      %p186 = scmp.eq.s32.totalorder %s22, 1
      %p187 = por %p185, %p186
      %p189 = scmp.ne.s32.totalorder %s172, %s188
      %p190 = scmp.eq.s32.totalorder %s22, 0
      %p191 = por %p189, %p190
      %s192 = ssub.s32 %s24, %s31
      %p193 = scmp.eq.s32.totalorder %s192, 0
      %s195 = sadd.s32 %s194, 1
      %s196 = scalar_select %p193, %s194, %s195
      %p199 = pneg %p193
      %p200 = scmp.eq.s32.totalorder %s16, 1
      %p201 = por %p199, %p200
      %p202 = scmp.ne.s32.totalorder %s194, %s197
      %p203 = scmp.eq.s32.totalorder %s16, 0
      %p204 = por %p202, %p203
      %p205 = scmp.ne.s32.totalorder %s194, %s197
      %p206 = scmp.eq.s32.totalorder %s21, 1
      %p207 = por %p205, %p206
      %p208 = scmp.ne.s32.totalorder %s197, %s198
      %p209 = scmp.eq.s32.totalorder %s21, 0
      %p210 = por %p208, %p209
      %p211 = scmp.ne.s32.totalorder %s197, %s198
      %p212 = scmp.eq.s32.totalorder %s22, 1
      %p213 = por %p211, %p212
      %p215 = scmp.ne.s32.totalorder %s198, %s214
      %p216 = scmp.eq.s32.totalorder %s22, 0
      %p217 = por %p215, %p216
      %s218 = ssub.s32 %s24, %s31
      %p219 = scmp.eq.s32.totalorder %s218, 0
      %s221 = sadd.s32 %s220, 1
      %s222 = scalar_select %p219, %s220, %s221
      %p225 = pneg %p219
      %p226 = scmp.eq.s32.totalorder %s16, 1
      %p227 = por %p225, %p226
      %p228 = scmp.ne.s32.totalorder %s220, %s223
      %p229 = scmp.eq.s32.totalorder %s16, 0
      %p230 = por %p228, %p229
      %p231 = scmp.ne.s32.totalorder %s220, %s223
      %p232 = scmp.eq.s32.totalorder %s21, 1
      %p233 = por %p231, %p232
      %p234 = scmp.ne.s32.totalorder %s223, %s224
      %p235 = scmp.eq.s32.totalorder %s21, 0
      %p236 = por %p234, %p235
      %p237 = scmp.ne.s32.totalorder %s223, %s224
      %p238 = scmp.eq.s32.totalorder %s22, 1
      %p239 = por %p237, %p238
      %p241 = scmp.ne.s32.totalorder %s224, %s240
      %p242 = scmp.eq.s32.totalorder %s22, 0
      %p243 = por %p241, %p242
      %s244 = ssub.s32 %s23, %s35
      %p245 = scmp.eq.s32.totalorder %s244, 0
      %s247 = sadd.s32 %s246, 1
      %s248 = scalar_select %p245, %s246, %s247
      %p251 = pneg %p245
      %p252 = scmp.eq.s32.totalorder %s16, 1
      %p253 = por %p251, %p252
      %p254 = scmp.ne.s32.totalorder %s246, %s249
      %p255 = scmp.eq.s32.totalorder %s16, 0
      %p256 = por %p254, %p255
      %p257 = scmp.ne.s32.totalorder %s246, %s249
      %p258 = scmp.eq.s32.totalorder %s21, 1
      %p259 = por %p257, %p258
      %p260 = scmp.ne.s32.totalorder %s249, %s250
      %p261 = scmp.eq.s32.totalorder %s21, 0
      %p262 = por %p260, %p261
      %p263 = scmp.ne.s32.totalorder %s249, %s250
      %p264 = scmp.eq.s32.totalorder %s22, 1
      %p265 = por %p263, %p264
      %p267 = scmp.ne.s32.totalorder %s250, %s266
      %p268 = scmp.eq.s32.totalorder %s22, 0
      %p269 = por %p267, %p268
      %p270 = scmp.le.s32.totalorder 1, %s16
      %p271 = scmp.lt.s32.totalorder %s16, 3
      %p272 = pnand %p270, %p271
      %p273 = pneg %p272
      // Predicated region
      $region9: #{tpu_custom_call.1} parent=5 // pred_check
        _
      $region10: #{tpu_custom_call.1} parent=5 // pred_check_branch
        %275 = sbr.rel (%p272) target = $region12
      $region11: #{tpu_custom_call.1} parent=5 // pred_region
        %s276 = ssub.s32 %s16, 1
        // Predicated region
        $region13: #{tpu_custom_call.1} parent=11 // pred_check
          %p277 = pneg %p54
        $region14: #{tpu_custom_call.1} parent=11 // pred_check_branch
          %279 = sbr.rel (%p277) target = $region16
        $region15: #{tpu_custom_call.1} parent=11 // pred_region
          %s280 = smul.u32 2, %s25
          %282 = vsyncadd [#allocation6], 0
          %s283 = smul.addr %s280, 8
          %s284 = scalar_lea.hbm %s0, %s283
          %s285 = sshll.u32 %s284, 4
          %s286 = int_to_ptr.hbm [resolvable:$true] %s285
          %s287 = sshll.u32 [#allocation5], 4
          %s288 = int_to_ptr.vmem [resolvable:$true] %s287
          %293 = dma.hbm_to_vmem [thread:$0]  %s286, 256, %s288, [#allocation6], 128, 128, 8
        $region16: #{tpu_custom_call.1} parent=11 // pred_fallthru
          _
        // Predicated region
        $region17: #{tpu_custom_call.1} parent=11 // pred_check
          %p294 = pneg %p80
        $region18: #{tpu_custom_call.1} parent=11 // pred_check_branch
          %296 = sbr.rel (%p294) target = $region20
        $region19: #{tpu_custom_call.1} parent=11 // pred_region
          %s297 = smul.u32 2, %s25
          %p298 = scmp.lt.s32.totalorder %s297, 1
          %s299 = scalar_select %p298, %s297, 1
          %s300 = smul.addr %s299, 8
          %s301 = scalar_lea.vmem %s1, %s300
          %s302 = smul.u32 2, %s25
        $region20: #{tpu_custom_call.1} parent=11 // pred_fallthru
          _
        // Predicated region
        $region21: #{tpu_custom_call.1} parent=11 // pred_check
          %p303 = pneg %p106
        $region22: #{tpu_custom_call.1} parent=11 // pred_check_branch
          %305 = sbr.rel (%p303) target = $region24
        $region23: #{tpu_custom_call.1} parent=11 // pred_region
          %s306 = smul.u32 2, %s25
          %p307 = scmp.lt.s32.totalorder %s306, 1
          %s308 = scalar_select %p307, %s306, 1
          %s309 = scalar_lea.vmem %s2, %s308
          %s310 = smul.u32 2, %s25
        $region24: #{tpu_custom_call.1} parent=11 // pred_fallthru
          _
      $region12: #{tpu_custom_call.1} parent=5 // pred_fallthru
        _
      %p311 = scmp.lt.s32.totalorder %s16, 2
      // Predicated region
      $region25: #{tpu_custom_call.1} parent=5 // pred_check
        %p312 = pneg %p311
      $region26: #{tpu_custom_call.1} parent=5 // pred_check_branch
        %314 = sbr.rel (%p312) target = $region28
      $region27: #{tpu_custom_call.1} parent=5 // pred_region
        // Predicated region
        $region29: #{tpu_custom_call.1} parent=27 // pred_check
          %p315 = pneg %p126
        $region30: #{tpu_custom_call.1} parent=27 // pred_check_branch
          %317 = sbr.rel (%p315) target = $region32
        $region31: #{tpu_custom_call.1} parent=27 // pred_region
          %p318 = scmp.lt.s32.totalorder %s24, 1
          %s319 = scalar_select %p318, %s24, 1
          %s320 = smul.addr %s319, 2
          %s321 = smul.addr %s320, 8
          %s322 = scalar_lea.vmem %s3, %s321
        $region32: #{tpu_custom_call.1} parent=27 // pred_fallthru
          _
        // Predicated region
        $region33: #{tpu_custom_call.1} parent=27 // pred_check
          %p323 = pneg %p152
        $region34: #{tpu_custom_call.1} parent=27 // pred_check_branch
          %325 = sbr.rel (%p323) target = $region36
        $region35: #{tpu_custom_call.1} parent=27 // pred_region
          %p326 = scmp.lt.s32.totalorder %s24, 1
          %s327 = scalar_select %p326, %s24, 1
          %s328 = smul.addr %s327, 4
          %s329 = smul.addr %s328, 8
          %s330 = scalar_lea.vmem %s4, %s329
        $region36: #{tpu_custom_call.1} parent=27 // pred_fallthru
          _
        // Predicated region
        $region37: #{tpu_custom_call.1} parent=27 // pred_check
          %p331 = pneg %p178
        $region38: #{tpu_custom_call.1} parent=27 // pred_check_branch
          %333 = sbr.rel (%p331) target = $region40
        $region39: #{tpu_custom_call.1} parent=27 // pred_region
          %p334 = scmp.lt.s32.totalorder %s24, 1
          %s335 = scalar_select %p334, %s24, 1
          %s336 = smul.addr %s335, 4
          %s337 = smul.addr %s336, 8
          %s338 = scalar_lea.vmem %s5, %s337
        $region40: #{tpu_custom_call.1} parent=27 // pred_fallthru
          _
        // Predicated region
        $region41: #{tpu_custom_call.1} parent=27 // pred_check
          %p339 = pneg %p204
        $region42: #{tpu_custom_call.1} parent=27 // pred_check_branch
          %341 = sbr.rel (%p339) target = $region44
        $region43: #{tpu_custom_call.1} parent=27 // pred_region
          %p342 = scmp.lt.s32.totalorder %s24, 1
          %s343 = scalar_select %p342, %s24, 1
          %s344 = smul.addr %s343, 4
          %s345 = smul.addr %s344, 8
          %s346 = scalar_lea.vmem %s6, %s345
        $region44: #{tpu_custom_call.1} parent=27 // pred_fallthru
          _
        // Predicated region
        $region45: #{tpu_custom_call.1} parent=27 // pred_check
          %p347 = pneg %p230
        $region46: #{tpu_custom_call.1} parent=27 // pred_check_branch
          %349 = sbr.rel (%p347) target = $region48
        $region47: #{tpu_custom_call.1} parent=27 // pred_region
          %p350 = scmp.lt.s32.totalorder %s24, 1
          %s351 = scalar_select %p350, %s24, 1
          %s352 = smul.addr %s351, 8
          %s353 = smul.addr %s352, 8
          %s354 = scalar_lea.vmem %s7, %s353
        $region48: #{tpu_custom_call.1} parent=27 // pred_fallthru
          _
      $region28: #{tpu_custom_call.1} parent=5 // pred_fallthru
        _
      %p355 = scmp.le.s32.totalorder 1, %s16
      %p356 = scmp.lt.s32.totalorder %s16, 3
      %p357 = pnand %p355, %p356
      %p358 = pneg %p357
      // Predicated region
      $region49: #{tpu_custom_call.1} parent=5 // pred_check
        _
      $region50: #{tpu_custom_call.1} parent=5 // pred_check_branch
        %360 = sbr.rel (%p357) target = $region52
      $region51: #{tpu_custom_call.1} parent=5 // pred_region
        %s361 = ssub.s32 %s16, 1
        // Predicated region
        $region53: #{tpu_custom_call.1} parent=51 // pred_check
          %p362 = pneg %p54
        $region54: #{tpu_custom_call.1} parent=51 // pred_check_branch
          %364 = sbr.rel (%p362) target = $region56
        $region55: #{tpu_custom_call.1} parent=51 // pred_region
          %366 = dma.done [#allocation6], 256
        $region56: #{tpu_custom_call.1} parent=51 // pred_fallthru
          _
        %p367 = pneg %p54
        %p368 = pneg %p51
        %s369 = smul.u32 2, %s25
        %p370 = scmp.lt.s32.totalorder %s369, 1
        %s371 = scalar_select %p370, %s369, 1
        %s372 = smul.addr %s371, 8
        %s373 = scalar_lea.vmem %s1, %s372
        %p374 = pneg %p80
        %p375 = pneg %p77
        %s376 = smul.u32 2, %s25
        %p377 = scmp.lt.s32.totalorder %s376, 1
        %s378 = scalar_select %p377, %s376, 1
        %s379 = scalar_lea.vmem %s2, %s378
        %p380 = pneg %p106
        %p381 = pneg %p103
        %p382 = scmp.lt.s32.totalorder %s26, 1
        %s383 = scalar_select %p382, %s26, 1
        %s384 = smul.addr %s383, 2
        %s385 = smul.addr %s384, 8
        %s386 = scalar_lea.vmem %s3, %s385
        %p387 = pneg %p132
        %p388 = pneg %p129
        %p389 = scmp.lt.s32.totalorder %s26, 1
        %s390 = scalar_select %p389, %s26, 1
        %s391 = smul.addr %s390, 4
        %s392 = smul.addr %s391, 8
        %s393 = scalar_lea.vmem %s4, %s392
        %p394 = pneg %p158
        %p395 = pneg %p155
        %p396 = scmp.lt.s32.totalorder %s26, 1
        %s397 = scalar_select %p396, %s26, 1
        %s398 = smul.addr %s397, 4
        %s399 = smul.addr %s398, 8
        %s400 = scalar_lea.vmem %s5, %s399
        %p401 = pneg %p184
        %p402 = pneg %p181
        %p403 = scmp.lt.s32.totalorder %s26, 1
        %s404 = scalar_select %p403, %s26, 1
        %s405 = smul.addr %s404, 4
        %s406 = smul.addr %s405, 8
        %s407 = scalar_lea.vmem %s6, %s406
        %p408 = pneg %p210
        %p409 = pneg %p207
        %p410 = scmp.lt.s32.totalorder %s26, 1
        %s411 = scalar_select %p410, %s26, 1
        %s412 = smul.addr %s411, 8
        %s413 = smul.addr %s412, 8
        %s414 = scalar_lea.vmem %s7, %s413
        %p415 = pneg %p236
        %p416 = pneg %p233
        %p417 = pneg %p262
        %p418 = pneg %p259
        %s419 = smul.u32 2, %s25
        %s420 = smul.u32 2, %s25
        %p421 = scmp.lt.s32.totalorder %s420, 1
        %s422 = scalar_select %p421, %s420, 1
        %s423 = smul.addr %s422, 8
        %s424 = scalar_lea.vmem %s1, %s423
        %s425 = smul.u32 2, %s25
        %s426 = smul.u32 2, %s25
        %p427 = scmp.lt.s32.totalorder %s426, 1
        %s428 = scalar_select %p427, %s426, 1
        %s429 = scalar_lea.vmem %s2, %s428
        %s430 = smul.u32 2, %s25
        %p431 = scmp.lt.s32.totalorder %s26, 1
        %s432 = scalar_select %p431, %s26, 1
        %s433 = smul.addr %s432, 2
        %s434 = smul.addr %s433, 8
        %s435 = scalar_lea.vmem %s3, %s434
        %p436 = scmp.lt.s32.totalorder %s26, 1
        %s437 = scalar_select %p436, %s26, 1
        %s438 = smul.addr %s437, 4
        %s439 = smul.addr %s438, 8
        %s440 = scalar_lea.vmem %s4, %s439
        %p441 = scmp.lt.s32.totalorder %s26, 1
        %s442 = scalar_select %p441, %s26, 1
        %s443 = smul.addr %s442, 4
        %s444 = smul.addr %s443, 8
        %s445 = scalar_lea.vmem %s5, %s444
        %p446 = scmp.lt.s32.totalorder %s26, 1
        %s447 = scalar_select %p446, %s26, 1
        %s448 = smul.addr %s447, 4
        %s449 = smul.addr %s448, 8
        %s450 = scalar_lea.vmem %s6, %s449
        %p451 = scmp.lt.s32.totalorder %s26, 1
        %s452 = scalar_select %p451, %s26, 1
        %s453 = smul.addr %s452, 8
        %s454 = smul.addr %s453, 8
        %s455 = scalar_lea.vmem %s7, %s454
        %s456 = smul.u32 2, %s25
        %p457 = scmp.eq.s32.totalorder %s26, 0
        // Predicated region
        $region57: #{tpu_custom_call.1} parent=51 // pred_check
          %p458 = pneg %p457
        $region58: #{tpu_custom_call.1} parent=51 // pred_check_branch
          %460 = sbr.rel (%p458) target = $region60
        $region59: #{tpu_custom_call.1} parent=51 // pred_region
          %v461 = vld [vmem:[#allocation5] sm:$0xff]
          %v462 = vld [vmem:[#allocation5 + $0x8] sm:$0xff]
          %vm463 = vcmask 261120
          %464 = vst.msk [vmem:[#allocation2] sm:$0xff] %vm463, %v461
          %465 = vst.msk [vmem:[#allocation2 + $0x8] sm:$0xff] %vm463, %v462
          %v466 = vld [vmem:[%s424] sm:$0xff]
          %v467 = vld [vmem:[%s424 + $0x8] sm:$0xff]
          %v468 = vld [vmem:[%s429] sm:$0x1]
          %v469 = vld [vmem:[%s429 + $0x1] sm:$0x1]
          %471 = vset.pattern.permute.xlu0 0
          %472 = vperm.xlu0 %471, %v466
          %v473 = vpop.permute.xlu0 %472
          %476 = vset.pattern.permute.xlu0 0
          %477 = vperm.xlu0 %476, %v467
          %v478 = vpop.permute.xlu0 %477
          %v482 = vperm.slane %v468, 0
          %v483 = vperm.slane %v469, 0
          %v486 = vadd.f32 %v473, %v482
          %v487 = vadd.f32 %v478, %v483
          %vm488 = vcmask 64512
          %489 = vst.msk [vmem:[#allocation3] sm:$0xff] %vm488, %v486
          %490 = vst.msk [vmem:[#allocation3 + $0x8] sm:$0xff] %vm488, %v487
        $region60: #{tpu_custom_call.1} parent=51 // pred_fallthru
          _
        %v491 = vld [vmem:[%s435] sm:$0xff]
        %v492 = vld [vmem:[%s435 + $0x8] sm:$0x1]
        %v493 = vld [vmem:[#allocation2] sm:$0xff]
        %v494 = vld [vmem:[#allocation2 + $0x8] sm:$0xff]
        %v495 = vld [vmem:[#allocation3] sm:$0xff]
        %v496 = vld [vmem:[#allocation3 + $0x8] sm:$0xff]
        %vm497 = vcmask 261120
        %v498 = vsel %vm497, %v493, 0.0
        %499 = vadd.xlane.f32.xlu0 %v498
        %v500 = vpop.xlane.xlu0 %499
        %v501 = vsel %vm497, %v494, 0.0
        %502 = vadd.xlane.f32.xlu0 %v501
        %v503 = vpop.xlane.xlu0 %502
        %v504 = vrcp.pop 32.0
        %v505 = vmul.f32 32.0, %v504
        %v506 = vsub.f32 1.0, %v505
        %v507 = vmul.f32 %v504, %v506
        %v508 = vadd.f32 %v504, %v507
        %vm509 = vweird.f32 %v504
        %v510 = vsel %vm509, %v504, %v508
        %v511 = vmul.f32 %v500, %v510
        %v512 = vmul.f32 %v503, %v510
        %v513 = vsub.f32 %v493, %v511
        %v514 = vsub.f32 %v494, %v512
        %v515 = vmul.f32 %v513, %v513
        %v516 = vmul.f32 %v514, %v514
        %v517 = vsel %vm497, %v515, 0.0
        %518 = vadd.xlane.f32.xlu0 %v517
        %v519 = vpop.xlane.xlu0 %518
        %v520 = vsel %vm497, %v516, 0.0
        %521 = vadd.xlane.f32.xlu0 %v520
        %v522 = vpop.xlane.xlu0 %521
        %v523 = vmul.f32 %v519, %v510
        %v524 = vmul.f32 %v522, %v510
        %v525 = vadd.f32 %v523, 1e-05
        %v526 = vadd.f32 %v524, 1e-05
        %v527 = vrsqrt.pop %v525
        %v528 = vmul.f32 %v527, %v525
        %v529 = vmul.f32 %v528, %v527
        %v530 = vmul.f32 0.5, %v529
        %v531 = vsub.f32 1.5, %v530
        %v532 = vmul.f32 %v527, %v531
        %vm533 = vweird.f32 %v525
        %vm534 = vweird.f32 %v527
        %vm535 = vmor %vm533, %vm534
        %v536 = vsel %vm535, %v527, %v532
        %v537 = vrsqrt.pop %v526
        %v538 = vmul.f32 %v537, %v526
        %v539 = vmul.f32 %v538, %v537
        %v540 = vmul.f32 0.5, %v539
        %v541 = vsub.f32 1.5, %v540
        %v542 = vmul.f32 %v537, %v541
        %vm543 = vweird.f32 %v526
        %vm544 = vweird.f32 %v537
        %vm545 = vmor %vm543, %vm544
        %v546 = vsel %vm545, %v537, %v542
        %v547 = vmul.f32 %v513, %v536
        %v548 = vmul.f32 %v514, %v546
        %v549 = vperm.slane %v491, 0
        %v550 = vmul.f32 %v547, %v549
        %v551 = vmul.f32 %v548, %v549
        %v552 = vperm.slane %v491, 1
        %v553 = vadd.f32 %v550, %v552
        %v554 = vadd.f32 %v551, %v552
        %v555 = vld [vmem:[%s440] sm:$0xff]
        %v556 = vld [vmem:[%s440 + $0x8] sm:$0xff]
        %v557 = vld [vmem:[%s440 + $0x10] sm:$0xff]
        %v558 = vld [vmem:[%s440 + $0x18] sm:$0xff]
        %v560 = vsel %vm497, %v553, 0
        %v563 = vsel %vm497, %v554, 0
        %565 = vmatpush.msra.mxu0 0.0
        %566 = vmatpush.msra.mxu0 0.0
        %567 = vmatpush.msra.mxu0 0.0
        %568 = vmatpush.msra.mxu0 0.0
        %569 = vmatpush.msra.mxu0 0.0
        %570 = vmatpush.msra.mxu0 0.0
        %571 = vmatpush.msra.mxu0 0.0
        %572 = vmatpush.msra.mxu0 0.0
        %573 = vmatpush.msra.mxu0 0.0
        %574 = vmatpush.msra.mxu0 0.0
        %575 = vmatpush.msra.mxu0 0.0
        %576 = vmatpush.msra.mxu0 0.0
        %577 = vmatpush.msra.mxu0 %v558
        %578 = vmatpush.msra.mxu0 %v557
        %579 = vmatpush.msra.mxu0 %v556
        %580 = vmatpush.msra.mxu0 %v555
        %581 = vmatmul.f32.gmra.mxu0 %v560
        %v582 = vpop.f32.mrf.mxu0
        %v583 = vadd.f32 0.0, %v582
        %584 = vmatmul.f32.gmra.mxu0 %v563
        %v585 = vpop.f32.mrf.mxu0
        %v586 = vadd.f32 0.0, %v585
        %587 = vdwg.mxu0
        %589 = vrot.lane.b32.xlu0 %v583, 96
        %v590 = vpop.permute.xlu0 %589
        %vm591 = vcmask 64512
        %v592 = vsel %vm591, %v583, 0
        %v594 = vsel %vm591, %v590, 0
        %596 = vmatpush.xpose.msra.mxu0 0.0
        %597 = vmatpush.xpose.msra.mxu0 0.0
        %598 = vmatpush.xpose.msra.mxu0 0.0
        %599 = vmatpush.xpose.msra.mxu0 0.0
        %600 = vmatpush.xpose.msra.mxu0 0.0
        %601 = vmatpush.xpose.msra.mxu0 0.0
        %602 = vmatpush.xpose.msra.mxu0 0.0
        %603 = vmatpush.xpose.msra.mxu0 0.0
        %604 = vmatpush.xpose.msra.mxu0 0.0
        %605 = vmatpush.xpose.msra.mxu0 0.0
        %606 = vmatpush.xpose.msra.mxu0 0.0
        %607 = vmatpush.xpose.msra.mxu0 0.0
        %608 = vmatpush.xpose.msra.mxu0 0.0
        %609 = vmatpush.xpose.msra.mxu0 0.0
        %610 = vmatpush.xpose.msra.mxu0 0.0
        %611 = vmatpush.xpose.msra.mxu0 %v594
        %612 = vmatmul.f32.gmra.mxu0 %v592
        %v613 = vpop.f32.mrf.mxu0
        %v614 = vadd.f32 %v495, %v613
        %615 = vdwg.mxu0
        %617 = vrot.lane.b32.xlu0 %v586, 96
        %v618 = vpop.permute.xlu0 %617
        %v619 = vsel %vm591, %v586, 0
        %v621 = vsel %vm591, %v618, 0
        %623 = vmatpush.xpose.msra.mxu0 0.0
        %624 = vmatpush.xpose.msra.mxu0 0.0
        %625 = vmatpush.xpose.msra.mxu0 0.0
        %626 = vmatpush.xpose.msra.mxu0 0.0
        %627 = vmatpush.xpose.msra.mxu0 0.0
        %628 = vmatpush.xpose.msra.mxu0 0.0
        %629 = vmatpush.xpose.msra.mxu0 0.0
        %630 = vmatpush.xpose.msra.mxu0 0.0
        %631 = vmatpush.xpose.msra.mxu0 0.0
        %632 = vmatpush.xpose.msra.mxu0 0.0
        %633 = vmatpush.xpose.msra.mxu0 0.0
        %634 = vmatpush.xpose.msra.mxu0 0.0
        %635 = vmatpush.xpose.msra.mxu0 0.0
        %636 = vmatpush.xpose.msra.mxu0 0.0
        %637 = vmatpush.xpose.msra.mxu0 0.0
        %638 = vmatpush.xpose.msra.mxu0 %v621
        %639 = vmatmul.f32.gmra.mxu0 %v619
        %v640 = vpop.f32.mrf.mxu0
        %v641 = vadd.f32 %v496, %v640
        %642 = vdwg.mxu0
        %v643 = vsel %vm591, %v614, -inf
        %644 = vmax.xlane.f32.xlu0 %v643
        %v645 = vpop.xlane.xlu0 %644
        %v646 = vsel %vm591, %v641, -inf
        %647 = vmax.xlane.f32.xlu0 %v646
        %v648 = vpop.xlane.xlu0 %647
        %v649 = vsub.f32 %v614, %v645
        %v650 = vsub.f32 %v641, %v648
        %v651 = vmul.f32 %v649, 1.442695
        %v652 = vpow.pop %v651
        %v653 = vmul.f32 %v650, 1.442695
        %v654 = vpow.pop %v653
        %v655 = vsel %vm591, %v652, 0.0
        %656 = vadd.xlane.f32.xlu0 %v655
        %v657 = vpop.xlane.xlu0 %656
        %v658 = vsel %vm591, %v654, 0.0
        %659 = vadd.xlane.f32.xlu0 %v658
        %v660 = vpop.xlane.xlu0 %659
        %v661 = vrcp.pop %v657
        %v662 = vmul.f32 %v657, %v661
        %v663 = vsub.f32 1.0, %v662
        %v664 = vmul.f32 %v661, %v663
        %v665 = vadd.f32 %v661, %v664
        %vm666 = vweird.f32 %v657
        %vm667 = vweird.f32 %v661
        %vm668 = vmor %vm666, %vm667
        %v669 = vsel %vm668, %v661, %v665
        %v670 = vand.u32 2147483647, %v657
        %vm671 = vcmp.eq.f32.partialorder %v670, 8.507059e+37
        %v672 = vand.u32 %v657, 2147483648
        %v673 = vor.u32 1.1754944e-38, %v672
        %v674 = vsel %vm671, %v673, %v669
        %v675 = vrcp.pop %v660
        %v676 = vmul.f32 %v660, %v675
        %v677 = vsub.f32 1.0, %v676
        %v678 = vmul.f32 %v675, %v677
        %v679 = vadd.f32 %v675, %v678
        %vm680 = vweird.f32 %v660
        %vm681 = vweird.f32 %v675
        %vm682 = vmor %vm680, %vm681
        %v683 = vsel %vm682, %v675, %v679
        %v684 = vand.u32 2147483647, %v660
        %vm685 = vcmp.eq.f32.partialorder %v684, 8.507059e+37
        %v686 = vand.u32 %v660, 2147483648
        %v687 = vor.u32 1.1754944e-38, %v686
        %v688 = vsel %vm685, %v687, %v683
        %v689 = vmul.f32 %v652, %v674
        %v690 = vmul.f32 %v654, %v688
        %691 = vrot.lane.b32.xlu0 %v583, 64
        %v692 = vpop.permute.xlu0 %691
        %v695 = vsel %vm591, %v689, 0
        %697 = vmatpush.msra.mxu0 0.0
        %698 = vmatpush.msra.mxu0 0.0
        %699 = vmatpush.msra.mxu0 0.0
        %700 = vmatpush.msra.mxu0 0.0
        %701 = vmatpush.msra.mxu0 0.0
        %702 = vmatpush.msra.mxu0 0.0
        %703 = vmatpush.msra.mxu0 0.0
        %704 = vmatpush.msra.mxu0 0.0
        %705 = vmatpush.msra.mxu0 0.0
        %706 = vmatpush.msra.mxu0 0.0
        %707 = vmatpush.msra.mxu0 0.0
        %708 = vmatpush.msra.mxu0 0.0
        %709 = vmatpush.msra.mxu0 0.0
        %710 = vmatpush.msra.mxu0 0.0
        %711 = vmatpush.msra.mxu0 0.0
        %712 = vmatpush.msra.mxu0 %v692
        %713 = vmatmul.f32.gmra.mxu0 %v695
        %v714 = vpop.f32.mrf.mxu0
        %v715 = vadd.f32 0.0, %v714
        %716 = vdwg.mxu0
        %717 = vrot.lane.b32.xlu0 %v586, 64
        %v718 = vpop.permute.xlu0 %717
        %v721 = vsel %vm591, %v690, 0
        %723 = vmatpush.msra.mxu0 0.0
        %724 = vmatpush.msra.mxu0 0.0
        %725 = vmatpush.msra.mxu0 0.0
        %726 = vmatpush.msra.mxu0 0.0
        %727 = vmatpush.msra.mxu0 0.0
        %728 = vmatpush.msra.mxu0 0.0
        %729 = vmatpush.msra.mxu0 0.0
        %730 = vmatpush.msra.mxu0 0.0
        %731 = vmatpush.msra.mxu0 0.0
        %732 = vmatpush.msra.mxu0 0.0
        %733 = vmatpush.msra.mxu0 0.0
        %734 = vmatpush.msra.mxu0 0.0
        %735 = vmatpush.msra.mxu0 0.0
        %736 = vmatpush.msra.mxu0 0.0
        %737 = vmatpush.msra.mxu0 0.0
        %738 = vmatpush.msra.mxu0 %v718
        %739 = vmatmul.f32.gmra.mxu0 %v721
        %v740 = vpop.f32.mrf.mxu0
        %v741 = vadd.f32 0.0, %v740
        %742 = vdwg.mxu0
        %743 = vst.msk [vmem:[#allocation4] sm:$0xff] %vm591, %v715
        %744 = vst.msk [vmem:[#allocation4 + $0x8] sm:$0xff] %vm591, %v741
        %745 = vrot.lane.b32.xlu0 %v583, 120
        %v746 = vpop.permute.xlu0 %745
        %747 = vrot.lane.b32.xlu0 %v583, 88
        %v748 = vpop.permute.xlu0 %747
        %v749 = vsel %vm591, %v746, 0
        %v751 = vsel %vm591, %v748, 0
        %753 = vmatpush.xpose.msra.mxu0 0.0
        %754 = vmatpush.xpose.msra.mxu0 0.0
        %755 = vmatpush.xpose.msra.mxu0 0.0
        %756 = vmatpush.xpose.msra.mxu0 0.0
        %757 = vmatpush.xpose.msra.mxu0 0.0
        %758 = vmatpush.xpose.msra.mxu0 0.0
        %759 = vmatpush.xpose.msra.mxu0 0.0
        %760 = vmatpush.xpose.msra.mxu0 0.0
        %761 = vmatpush.xpose.msra.mxu0 0.0
        %762 = vmatpush.xpose.msra.mxu0 0.0
        %763 = vmatpush.xpose.msra.mxu0 0.0
        %764 = vmatpush.xpose.msra.mxu0 0.0
        %765 = vmatpush.xpose.msra.mxu0 0.0
        %766 = vmatpush.xpose.msra.mxu0 0.0
        %767 = vmatpush.xpose.msra.mxu0 0.0
        %768 = vmatpush.xpose.msra.mxu0 %v751
        %769 = vmatmul.f32.gmra.mxu0 %v749
        %v770 = vpop.f32.mrf.mxu0
        %v771 = vadd.f32 %v495, %v770
        %772 = vdwg.mxu0
        %773 = vrot.lane.b32.xlu0 %v586, 120
        %v774 = vpop.permute.xlu0 %773
        %775 = vrot.lane.b32.xlu0 %v586, 88
        %v776 = vpop.permute.xlu0 %775
        %v777 = vsel %vm591, %v774, 0
        %v779 = vsel %vm591, %v776, 0
        %781 = vmatpush.xpose.msra.mxu0 0.0
        %782 = vmatpush.xpose.msra.mxu0 0.0
        %783 = vmatpush.xpose.msra.mxu0 0.0
        %784 = vmatpush.xpose.msra.mxu0 0.0
        %785 = vmatpush.xpose.msra.mxu0 0.0
        %786 = vmatpush.xpose.msra.mxu0 0.0
        %787 = vmatpush.xpose.msra.mxu0 0.0
        %788 = vmatpush.xpose.msra.mxu0 0.0
        %789 = vmatpush.xpose.msra.mxu0 0.0
        %790 = vmatpush.xpose.msra.mxu0 0.0
        %791 = vmatpush.xpose.msra.mxu0 0.0
        %792 = vmatpush.xpose.msra.mxu0 0.0
        %793 = vmatpush.xpose.msra.mxu0 0.0
        %794 = vmatpush.xpose.msra.mxu0 0.0
        %795 = vmatpush.xpose.msra.mxu0 0.0
        %796 = vmatpush.xpose.msra.mxu0 %v779
        %797 = vmatmul.f32.gmra.mxu0 %v777
        %v798 = vpop.f32.mrf.mxu0
        %v799 = vadd.f32 %v496, %v798
        %800 = vdwg.mxu0
        %v801 = vsel %vm591, %v771, -inf
        %802 = vmax.xlane.f32.xlu0 %v801
        %v803 = vpop.xlane.xlu0 %802
        %v804 = vsel %vm591, %v799, -inf
        %805 = vmax.xlane.f32.xlu0 %v804
        %v806 = vpop.xlane.xlu0 %805
        %v807 = vsub.f32 %v771, %v803
        %v808 = vsub.f32 %v799, %v806
        %v809 = vmul.f32 %v807, 1.442695
        %v810 = vpow.pop %v809
        %v811 = vmul.f32 %v808, 1.442695
        %v812 = vpow.pop %v811
        %v813 = vsel %vm591, %v810, 0.0
        %814 = vadd.xlane.f32.xlu0 %v813
        %v815 = vpop.xlane.xlu0 %814
        %v816 = vsel %vm591, %v812, 0.0
        %817 = vadd.xlane.f32.xlu0 %v816
        %v818 = vpop.xlane.xlu0 %817
        %v819 = vrcp.pop %v815
        %v820 = vmul.f32 %v815, %v819
        %v821 = vsub.f32 1.0, %v820
        %v822 = vmul.f32 %v819, %v821
        %v823 = vadd.f32 %v819, %v822
        %vm824 = vweird.f32 %v815
        %vm825 = vweird.f32 %v819
        %vm826 = vmor %vm824, %vm825
        %v827 = vsel %vm826, %v819, %v823
        %v828 = vand.u32 2147483647, %v815
        %vm829 = vcmp.eq.f32.partialorder %v828, 8.507059e+37
        %v830 = vand.u32 %v815, 2147483648
        %v831 = vor.u32 1.1754944e-38, %v830
        %v832 = vsel %vm829, %v831, %v827
        %v833 = vrcp.pop %v818
        %v834 = vmul.f32 %v818, %v833
        %v835 = vsub.f32 1.0, %v834
        %v836 = vmul.f32 %v833, %v835
        %v837 = vadd.f32 %v833, %v836
        %vm838 = vweird.f32 %v818
        %vm839 = vweird.f32 %v833
        %vm840 = vmor %vm838, %vm839
        %v841 = vsel %vm840, %v833, %v837
        %v842 = vand.u32 2147483647, %v818
        %vm843 = vcmp.eq.f32.partialorder %v842, 8.507059e+37
        %v844 = vand.u32 %v818, 2147483648
        %v845 = vor.u32 1.1754944e-38, %v844
        %v846 = vsel %vm843, %v845, %v841
        %v847 = vmul.f32 %v810, %v832
        %v848 = vmul.f32 %v812, %v846
        %849 = vrot.lane.b32.xlu0 %v583, 56
        %v850 = vpop.permute.xlu0 %849
        %v853 = vsel %vm591, %v847, 0
        %855 = vmatpush.msra.mxu0 0.0
        %856 = vmatpush.msra.mxu0 0.0
        %857 = vmatpush.msra.mxu0 0.0
        %858 = vmatpush.msra.mxu0 0.0
        %859 = vmatpush.msra.mxu0 0.0
        %860 = vmatpush.msra.mxu0 0.0
        %861 = vmatpush.msra.mxu0 0.0
        %862 = vmatpush.msra.mxu0 0.0
        %863 = vmatpush.msra.mxu0 0.0
        %864 = vmatpush.msra.mxu0 0.0
        %865 = vmatpush.msra.mxu0 0.0
        %866 = vmatpush.msra.mxu0 0.0
        %867 = vmatpush.msra.mxu0 0.0
        %868 = vmatpush.msra.mxu0 0.0
        %869 = vmatpush.msra.mxu0 0.0
        %870 = vmatpush.msra.mxu0 %v850
        %871 = vmatmul.f32.gmra.mxu0 %v853
        %v872 = vpop.f32.mrf.mxu0
        %v873 = vadd.f32 0.0, %v872
        %874 = vdwg.mxu0
        %875 = vrot.lane.b32.xlu0 %v586, 56
        %v876 = vpop.permute.xlu0 %875
        %v879 = vsel %vm591, %v848, 0
        %881 = vmatpush.msra.mxu0 0.0
        %882 = vmatpush.msra.mxu0 0.0
        %883 = vmatpush.msra.mxu0 0.0
        %884 = vmatpush.msra.mxu0 0.0
        %885 = vmatpush.msra.mxu0 0.0
        %886 = vmatpush.msra.mxu0 0.0
        %887 = vmatpush.msra.mxu0 0.0
        %888 = vmatpush.msra.mxu0 0.0
        %889 = vmatpush.msra.mxu0 0.0
        %890 = vmatpush.msra.mxu0 0.0
        %891 = vmatpush.msra.mxu0 0.0
        %892 = vmatpush.msra.mxu0 0.0
        %893 = vmatpush.msra.mxu0 0.0
        %894 = vmatpush.msra.mxu0 0.0
        %895 = vmatpush.msra.mxu0 0.0
        %896 = vmatpush.msra.mxu0 %v876
        %897 = vmatmul.f32.gmra.mxu0 %v879
        %v898 = vpop.f32.mrf.mxu0
        %v899 = vadd.f32 0.0, %v898
        %900 = vdwg.mxu0
        %903 = vrot.lane.b32.xlu0 %v873, 8
        %v904 = vpop.permute.xlu0 %903
        %905 = vrot.lane.b32.xlu0 %v899, 8
        %v906 = vpop.permute.xlu0 %905
        %vm909 = vcmask 130112
        %910 = vst.msk [vmem:[#allocation4] sm:$0xff] %vm909, %v904
        %911 = vst.msk [vmem:[#allocation4 + $0x8] sm:$0xff] %vm909, %v906
        %912 = vrot.lane.b32.xlu0 %v583, 112
        %v913 = vpop.permute.xlu0 %912
        %914 = vrot.lane.b32.xlu0 %v583, 80
        %v915 = vpop.permute.xlu0 %914
        %v916 = vsel %vm591, %v913, 0
        %v918 = vsel %vm591, %v915, 0
        %920 = vmatpush.xpose.msra.mxu0 0.0
        %921 = vmatpush.xpose.msra.mxu0 0.0
        %922 = vmatpush.xpose.msra.mxu0 0.0
        %923 = vmatpush.xpose.msra.mxu0 0.0
        %924 = vmatpush.xpose.msra.mxu0 0.0
        %925 = vmatpush.xpose.msra.mxu0 0.0
        %926 = vmatpush.xpose.msra.mxu0 0.0
        %927 = vmatpush.xpose.msra.mxu0 0.0
        %928 = vmatpush.xpose.msra.mxu0 0.0
        %929 = vmatpush.xpose.msra.mxu0 0.0
        %930 = vmatpush.xpose.msra.mxu0 0.0
        %931 = vmatpush.xpose.msra.mxu0 0.0
        %932 = vmatpush.xpose.msra.mxu0 0.0
        %933 = vmatpush.xpose.msra.mxu0 0.0
        %934 = vmatpush.xpose.msra.mxu0 0.0
        %935 = vmatpush.xpose.msra.mxu0 %v918
        %936 = vmatmul.f32.gmra.mxu0 %v916
        %v937 = vpop.f32.mrf.mxu0
        %v938 = vadd.f32 %v495, %v937
        %939 = vdwg.mxu0
        %940 = vrot.lane.b32.xlu0 %v586, 112
        %v941 = vpop.permute.xlu0 %940
        %942 = vrot.lane.b32.xlu0 %v586, 80
        %v943 = vpop.permute.xlu0 %942
        %v944 = vsel %vm591, %v941, 0
        %v946 = vsel %vm591, %v943, 0
        %948 = vmatpush.xpose.msra.mxu0 0.0
        %949 = vmatpush.xpose.msra.mxu0 0.0
        %950 = vmatpush.xpose.msra.mxu0 0.0
        %951 = vmatpush.xpose.msra.mxu0 0.0
        %952 = vmatpush.xpose.msra.mxu0 0.0
        %953 = vmatpush.xpose.msra.mxu0 0.0
        %954 = vmatpush.xpose.msra.mxu0 0.0
        %955 = vmatpush.xpose.msra.mxu0 0.0
        %956 = vmatpush.xpose.msra.mxu0 0.0
        %957 = vmatpush.xpose.msra.mxu0 0.0
        %958 = vmatpush.xpose.msra.mxu0 0.0
        %959 = vmatpush.xpose.msra.mxu0 0.0
        %960 = vmatpush.xpose.msra.mxu0 0.0
        %961 = vmatpush.xpose.msra.mxu0 0.0
        %962 = vmatpush.xpose.msra.mxu0 0.0
        %963 = vmatpush.xpose.msra.mxu0 %v946
        %964 = vmatmul.f32.gmra.mxu0 %v944
        %v965 = vpop.f32.mrf.mxu0
        %v966 = vadd.f32 %v496, %v965
        %967 = vdwg.mxu0
        %v968 = vsel %vm591, %v938, -inf
        %969 = vmax.xlane.f32.xlu0 %v968
        %v970 = vpop.xlane.xlu0 %969
        %v971 = vsel %vm591, %v966, -inf
        %972 = vmax.xlane.f32.xlu0 %v971
        %v973 = vpop.xlane.xlu0 %972
        %v974 = vsub.f32 %v938, %v970
        %v975 = vsub.f32 %v966, %v973
        %v976 = vmul.f32 %v974, 1.442695
        %v977 = vpow.pop %v976
        %v978 = vmul.f32 %v975, 1.442695
        %v979 = vpow.pop %v978
        %v980 = vsel %vm591, %v977, 0.0
        %981 = vadd.xlane.f32.xlu0 %v980
        %v982 = vpop.xlane.xlu0 %981
        %v983 = vsel %vm591, %v979, 0.0
        %984 = vadd.xlane.f32.xlu0 %v983
        %v985 = vpop.xlane.xlu0 %984
        %v986 = vrcp.pop %v982
        %v987 = vmul.f32 %v982, %v986
        %v988 = vsub.f32 1.0, %v987
        %v989 = vmul.f32 %v986, %v988
        %v990 = vadd.f32 %v986, %v989
        %vm991 = vweird.f32 %v982
        %vm992 = vweird.f32 %v986
        %vm993 = vmor %vm991, %vm992
        %v994 = vsel %vm993, %v986, %v990
        %v995 = vand.u32 2147483647, %v982
        %vm996 = vcmp.eq.f32.partialorder %v995, 8.507059e+37
        %v997 = vand.u32 %v982, 2147483648
        %v998 = vor.u32 1.1754944e-38, %v997
        %v999 = vsel %vm996, %v998, %v994
        %v1000 = vrcp.pop %v985
        %v1001 = vmul.f32 %v985, %v1000
        %v1002 = vsub.f32 1.0, %v1001
        %v1003 = vmul.f32 %v1000, %v1002
        %v1004 = vadd.f32 %v1000, %v1003
        %vm1005 = vweird.f32 %v985
        %vm1006 = vweird.f32 %v1000
        %vm1007 = vmor %vm1005, %vm1006
        %v1008 = vsel %vm1007, %v1000, %v1004
        %v1009 = vand.u32 2147483647, %v985
        %vm1010 = vcmp.eq.f32.partialorder %v1009, 8.507059e+37
        %v1011 = vand.u32 %v985, 2147483648
        %v1012 = vor.u32 1.1754944e-38, %v1011
        %v1013 = vsel %vm1010, %v1012, %v1008
        %v1014 = vmul.f32 %v977, %v999
        %v1015 = vmul.f32 %v979, %v1013
        %1016 = vrot.lane.b32.xlu0 %v583, 48
        %v1017 = vpop.permute.xlu0 %1016
        %v1020 = vsel %vm591, %v1014, 0
        %1022 = vmatpush.msra.mxu0 0.0
        %1023 = vmatpush.msra.mxu0 0.0
        %1024 = vmatpush.msra.mxu0 0.0
        %1025 = vmatpush.msra.mxu0 0.0
        %1026 = vmatpush.msra.mxu0 0.0
        %1027 = vmatpush.msra.mxu0 0.0
        %1028 = vmatpush.msra.mxu0 0.0
        %1029 = vmatpush.msra.mxu0 0.0
        %1030 = vmatpush.msra.mxu0 0.0
        %1031 = vmatpush.msra.mxu0 0.0
        %1032 = vmatpush.msra.mxu0 0.0
        %1033 = vmatpush.msra.mxu0 0.0
        %1034 = vmatpush.msra.mxu0 0.0
        %1035 = vmatpush.msra.mxu0 0.0
        %1036 = vmatpush.msra.mxu0 0.0
        %1037 = vmatpush.msra.mxu0 %v1017
        %1038 = vmatmul.f32.gmra.mxu0 %v1020
        %v1039 = vpop.f32.mrf.mxu0
        %v1040 = vadd.f32 0.0, %v1039
        %1041 = vdwg.mxu0
        %1042 = vrot.lane.b32.xlu0 %v586, 48
        %v1043 = vpop.permute.xlu0 %1042
        %v1046 = vsel %vm591, %v1015, 0
        %1048 = vmatpush.msra.mxu0 0.0
        %1049 = vmatpush.msra.mxu0 0.0
        %1050 = vmatpush.msra.mxu0 0.0
        %1051 = vmatpush.msra.mxu0 0.0
        %1052 = vmatpush.msra.mxu0 0.0
        %1053 = vmatpush.msra.mxu0 0.0
        %1054 = vmatpush.msra.mxu0 0.0
        %1055 = vmatpush.msra.mxu0 0.0
        %1056 = vmatpush.msra.mxu0 0.0
        %1057 = vmatpush.msra.mxu0 0.0
        %1058 = vmatpush.msra.mxu0 0.0
        %1059 = vmatpush.msra.mxu0 0.0
        %1060 = vmatpush.msra.mxu0 0.0
        %1061 = vmatpush.msra.mxu0 0.0
        %1062 = vmatpush.msra.mxu0 0.0
        %1063 = vmatpush.msra.mxu0 %v1043
        %1064 = vmatmul.f32.gmra.mxu0 %v1046
        %v1065 = vpop.f32.mrf.mxu0
        %v1066 = vadd.f32 0.0, %v1065
        %1067 = vdwg.mxu0
        %1070 = vrot.lane.b32.xlu0 %v1040, 16
        %v1071 = vpop.permute.xlu0 %1070
        %1072 = vrot.lane.b32.xlu0 %v1066, 16
        %v1073 = vpop.permute.xlu0 %1072
        %vm1076 = vcmask 195712
        %1077 = vst.msk [vmem:[#allocation4] sm:$0xff] %vm1076, %v1071
        %1078 = vst.msk [vmem:[#allocation4 + $0x8] sm:$0xff] %vm1076, %v1073
        %1079 = vrot.lane.b32.xlu0 %v583, 104
        %v1080 = vpop.permute.xlu0 %1079
        %1081 = vrot.lane.b32.xlu0 %v583, 72
        %v1082 = vpop.permute.xlu0 %1081
        %v1083 = vsel %vm591, %v1080, 0
        %v1085 = vsel %vm591, %v1082, 0
        %1087 = vmatpush.xpose.msra.mxu0 0.0
        %1088 = vmatpush.xpose.msra.mxu0 0.0
        %1089 = vmatpush.xpose.msra.mxu0 0.0
        %1090 = vmatpush.xpose.msra.mxu0 0.0
        %1091 = vmatpush.xpose.msra.mxu0 0.0
        %1092 = vmatpush.xpose.msra.mxu0 0.0
        %1093 = vmatpush.xpose.msra.mxu0 0.0
        %1094 = vmatpush.xpose.msra.mxu0 0.0
        %1095 = vmatpush.xpose.msra.mxu0 0.0
        %1096 = vmatpush.xpose.msra.mxu0 0.0
        %1097 = vmatpush.xpose.msra.mxu0 0.0
        %1098 = vmatpush.xpose.msra.mxu0 0.0
        %1099 = vmatpush.xpose.msra.mxu0 0.0
        %1100 = vmatpush.xpose.msra.mxu0 0.0
        %1101 = vmatpush.xpose.msra.mxu0 0.0
        %1102 = vmatpush.xpose.msra.mxu0 %v1085
        %1103 = vmatmul.f32.gmra.mxu0 %v1083
        %v1104 = vpop.f32.mrf.mxu0
        %v1105 = vadd.f32 %v495, %v1104
        %1106 = vdwg.mxu0
        %1107 = vrot.lane.b32.xlu0 %v586, 104
        %v1108 = vpop.permute.xlu0 %1107
        %1109 = vrot.lane.b32.xlu0 %v586, 72
        %v1110 = vpop.permute.xlu0 %1109
        %v1111 = vsel %vm591, %v1108, 0
        %v1113 = vsel %vm591, %v1110, 0
        %1115 = vmatpush.xpose.msra.mxu0 0.0
        %1116 = vmatpush.xpose.msra.mxu0 0.0
        %1117 = vmatpush.xpose.msra.mxu0 0.0
        %1118 = vmatpush.xpose.msra.mxu0 0.0
        %1119 = vmatpush.xpose.msra.mxu0 0.0
        %1120 = vmatpush.xpose.msra.mxu0 0.0
        %1121 = vmatpush.xpose.msra.mxu0 0.0
        %1122 = vmatpush.xpose.msra.mxu0 0.0
        %1123 = vmatpush.xpose.msra.mxu0 0.0
        %1124 = vmatpush.xpose.msra.mxu0 0.0
        %1125 = vmatpush.xpose.msra.mxu0 0.0
        %1126 = vmatpush.xpose.msra.mxu0 0.0
        %1127 = vmatpush.xpose.msra.mxu0 0.0
        %1128 = vmatpush.xpose.msra.mxu0 0.0
        %1129 = vmatpush.xpose.msra.mxu0 0.0
        %1130 = vmatpush.xpose.msra.mxu0 %v1113
        %1131 = vmatmul.f32.gmra.mxu0 %v1111
        %v1132 = vpop.f32.mrf.mxu0
        %v1133 = vadd.f32 %v496, %v1132
        %1134 = vdwg.mxu0
        %v1135 = vsel %vm591, %v1105, -inf
        %1136 = vmax.xlane.f32.xlu0 %v1135
        %v1137 = vpop.xlane.xlu0 %1136
        %v1138 = vsel %vm591, %v1133, -inf
        %1139 = vmax.xlane.f32.xlu0 %v1138
        %v1140 = vpop.xlane.xlu0 %1139
        %v1141 = vsub.f32 %v1105, %v1137
        %v1142 = vsub.f32 %v1133, %v1140
        %v1143 = vmul.f32 %v1141, 1.442695
        %v1144 = vpow.pop %v1143
        %v1145 = vmul.f32 %v1142, 1.442695
        %v1146 = vpow.pop %v1145
        %v1147 = vsel %vm591, %v1144, 0.0
        %1148 = vadd.xlane.f32.xlu0 %v1147
        %v1149 = vpop.xlane.xlu0 %1148
        %v1150 = vsel %vm591, %v1146, 0.0
        %1151 = vadd.xlane.f32.xlu0 %v1150
        %v1152 = vpop.xlane.xlu0 %1151
        %v1153 = vrcp.pop %v1149
        %v1154 = vmul.f32 %v1149, %v1153
        %v1155 = vsub.f32 1.0, %v1154
        %v1156 = vmul.f32 %v1153, %v1155
        %v1157 = vadd.f32 %v1153, %v1156
        %vm1158 = vweird.f32 %v1149
        %vm1159 = vweird.f32 %v1153
        %vm1160 = vmor %vm1158, %vm1159
        %v1161 = vsel %vm1160, %v1153, %v1157
        %v1162 = vand.u32 2147483647, %v1149
        %vm1163 = vcmp.eq.f32.partialorder %v1162, 8.507059e+37
        %v1164 = vand.u32 %v1149, 2147483648
        %v1165 = vor.u32 1.1754944e-38, %v1164
        %v1166 = vsel %vm1163, %v1165, %v1161
        %v1167 = vrcp.pop %v1152
        %v1168 = vmul.f32 %v1152, %v1167
        %v1169 = vsub.f32 1.0, %v1168
        %v1170 = vmul.f32 %v1167, %v1169
        %v1171 = vadd.f32 %v1167, %v1170
        %vm1172 = vweird.f32 %v1152
        %vm1173 = vweird.f32 %v1167
        %vm1174 = vmor %vm1172, %vm1173
        %v1175 = vsel %vm1174, %v1167, %v1171
        %v1176 = vand.u32 2147483647, %v1152
        %vm1177 = vcmp.eq.f32.partialorder %v1176, 8.507059e+37
        %v1178 = vand.u32 %v1152, 2147483648
        %v1179 = vor.u32 1.1754944e-38, %v1178
        %v1180 = vsel %vm1177, %v1179, %v1175
        %v1181 = vmul.f32 %v1144, %v1166
        %v1182 = vmul.f32 %v1146, %v1180
        %1183 = vrot.lane.b32.xlu0 %v583, 40
        %v1184 = vpop.permute.xlu0 %1183
        %v1187 = vsel %vm591, %v1181, 0
        %1189 = vmatpush.msra.mxu0 0.0
        %1190 = vmatpush.msra.mxu0 0.0
        %1191 = vmatpush.msra.mxu0 0.0
        %1192 = vmatpush.msra.mxu0 0.0
        %1193 = vmatpush.msra.mxu0 0.0
        %1194 = vmatpush.msra.mxu0 0.0
        %1195 = vmatpush.msra.mxu0 0.0
        %1196 = vmatpush.msra.mxu0 0.0
        %1197 = vmatpush.msra.mxu0 0.0
        %1198 = vmatpush.msra.mxu0 0.0
        %1199 = vmatpush.msra.mxu0 0.0
        %1200 = vmatpush.msra.mxu0 0.0
        %1201 = vmatpush.msra.mxu0 0.0
        %1202 = vmatpush.msra.mxu0 0.0
        %1203 = vmatpush.msra.mxu0 0.0
        %1204 = vmatpush.msra.mxu0 %v1184
        %1205 = vmatmul.f32.gmra.mxu0 %v1187
        %v1206 = vpop.f32.mrf.mxu0
        %v1207 = vadd.f32 0.0, %v1206
        %1208 = vdwg.mxu0
        %1209 = vrot.lane.b32.xlu0 %v586, 40
        %v1210 = vpop.permute.xlu0 %1209
        %v1213 = vsel %vm591, %v1182, 0
        %1215 = vmatpush.msra.mxu0 0.0
        %1216 = vmatpush.msra.mxu0 0.0
        %1217 = vmatpush.msra.mxu0 0.0
        %1218 = vmatpush.msra.mxu0 0.0
        %1219 = vmatpush.msra.mxu0 0.0
        %1220 = vmatpush.msra.mxu0 0.0
        %1221 = vmatpush.msra.mxu0 0.0
        %1222 = vmatpush.msra.mxu0 0.0
        %1223 = vmatpush.msra.mxu0 0.0
        %1224 = vmatpush.msra.mxu0 0.0
        %1225 = vmatpush.msra.mxu0 0.0
        %1226 = vmatpush.msra.mxu0 0.0
        %1227 = vmatpush.msra.mxu0 0.0
        %1228 = vmatpush.msra.mxu0 0.0
        %1229 = vmatpush.msra.mxu0 0.0
        %1230 = vmatpush.msra.mxu0 %v1210
        %1231 = vmatmul.f32.gmra.mxu0 %v1213
        %v1232 = vpop.f32.mrf.mxu0
        %v1233 = vadd.f32 0.0, %v1232
        %1234 = vdwg.mxu0
        %1237 = vrot.lane.b32.xlu0 %v1207, 24
        %v1238 = vpop.permute.xlu0 %1237
        %1239 = vrot.lane.b32.xlu0 %v1233, 24
        %v1240 = vpop.permute.xlu0 %1239
        %vm1243 = vcmask 261312
        %1244 = vst.msk [vmem:[#allocation4] sm:$0xff] %vm1243, %v1238
        %1245 = vst.msk [vmem:[#allocation4 + $0x8] sm:$0xff] %vm1243, %v1240
        %v1246 = vld [vmem:[#allocation4] sm:$0xff]
        %v1247 = vld [vmem:[#allocation4 + $0x8] sm:$0xff]
        %v1248 = vld [vmem:[%s445] sm:$0xff]
        %v1249 = vld [vmem:[%s445 + $0x8] sm:$0xff]
        %v1250 = vld [vmem:[%s445 + $0x10] sm:$0xff]
        %v1251 = vld [vmem:[%s445 + $0x18] sm:$0xff]
        %v1252 = vperm.slane %v491, 2
        %v1254 = vsel %vm497, %v1246, 0
        %v1257 = vsel %vm497, %v1247, 0
        %1259 = vmatpush.msra.mxu0 0.0
        %1260 = vmatpush.msra.mxu0 0.0
        %1261 = vmatpush.msra.mxu0 0.0
        %1262 = vmatpush.msra.mxu0 0.0
        %1263 = vmatpush.msra.mxu0 0.0
        %1264 = vmatpush.msra.mxu0 0.0
        %1265 = vmatpush.msra.mxu0 0.0
        %1266 = vmatpush.msra.mxu0 0.0
        %1267 = vmatpush.msra.mxu0 0.0
        %1268 = vmatpush.msra.mxu0 0.0
        %1269 = vmatpush.msra.mxu0 0.0
        %1270 = vmatpush.msra.mxu0 0.0
        %1271 = vmatpush.msra.mxu0 %v1251
        %1272 = vmatpush.msra.mxu0 %v1250
        %1273 = vmatpush.msra.mxu0 %v1249
        %1274 = vmatpush.msra.mxu0 %v1248
        %1275 = vmatmul.f32.gmra.mxu0 %v1254
        %v1276 = vpop.f32.mrf.mxu0
        %v1277 = vadd.f32 %v1252, %v1276
        %1278 = vmatmul.f32.gmra.mxu0 %v1257
        %v1279 = vpop.f32.mrf.mxu0
        %v1280 = vadd.f32 %v1252, %v1279
        %1281 = vdwg.mxu0
        %v1282 = vadd.f32 %v1277, %v493
        %v1283 = vadd.f32 %v1280, %v494
        %v1284 = vsel %vm497, %v1282, 0.0
        %1285 = vadd.xlane.f32.xlu0 %v1284
        %v1286 = vpop.xlane.xlu0 %1285
        %v1287 = vsel %vm497, %v1283, 0.0
        %1288 = vadd.xlane.f32.xlu0 %v1287
        %v1289 = vpop.xlane.xlu0 %1288
        %v1290 = vmul.f32 %v1286, %v510
        %v1291 = vmul.f32 %v1289, %v510
        %v1292 = vsub.f32 %v1282, %v1290
        %v1293 = vsub.f32 %v1283, %v1291
        %v1294 = vmul.f32 %v1292, %v1292
        %v1295 = vmul.f32 %v1293, %v1293
        %v1296 = vsel %vm497, %v1294, 0.0
        %1297 = vadd.xlane.f32.xlu0 %v1296
        %v1298 = vpop.xlane.xlu0 %1297
        %v1299 = vsel %vm497, %v1295, 0.0
        %1300 = vadd.xlane.f32.xlu0 %v1299
        %v1301 = vpop.xlane.xlu0 %1300
        %v1302 = vmul.f32 %v1298, %v510
        %v1303 = vmul.f32 %v1301, %v510
        %v1304 = vadd.f32 %v1302, 1e-05
        %v1305 = vadd.f32 %v1303, 1e-05
        %v1306 = vrsqrt.pop %v1304
        %v1307 = vmul.f32 %v1306, %v1304
        %v1308 = vmul.f32 %v1307, %v1306
        %v1309 = vmul.f32 0.5, %v1308
        %v1310 = vsub.f32 1.5, %v1309
        %v1311 = vmul.f32 %v1306, %v1310
        %vm1312 = vweird.f32 %v1304
        %vm1313 = vweird.f32 %v1306
        %vm1314 = vmor %vm1312, %vm1313
        %v1315 = vsel %vm1314, %v1306, %v1311
        %v1316 = vrsqrt.pop %v1305
        %v1317 = vmul.f32 %v1316, %v1305
        %v1318 = vmul.f32 %v1317, %v1316
        %v1319 = vmul.f32 0.5, %v1318
        %v1320 = vsub.f32 1.5, %v1319
        %v1321 = vmul.f32 %v1316, %v1320
        %vm1322 = vweird.f32 %v1305
        %vm1323 = vweird.f32 %v1316
        %vm1324 = vmor %vm1322, %vm1323
        %v1325 = vsel %vm1324, %v1316, %v1321
        %v1326 = vmul.f32 %v1292, %v1315
        %v1327 = vmul.f32 %v1293, %v1325
        %v1328 = vperm.slane %v491, 3
        %v1329 = vmul.f32 %v1326, %v1328
        %v1330 = vmul.f32 %v1327, %v1328
        %v1331 = vperm.slane %v491, 4
        %v1332 = vadd.f32 %v1329, %v1331
        %v1333 = vadd.f32 %v1330, %v1331
        %v1334 = vld [vmem:[%s450] sm:$0xff]
        %v1335 = vld [vmem:[%s450 + $0x8] sm:$0xff]
        %v1336 = vld [vmem:[%s450 + $0x10] sm:$0xff]
        %v1337 = vld [vmem:[%s450 + $0x18] sm:$0xff]
        %v1338 = vperm.slane %v491, 5
        %v1340 = vsel %vm497, %v1332, 0
        %v1343 = vsel %vm497, %v1333, 0
        %1345 = vmatpush.msra.mxu0 0.0
        %1346 = vmatpush.msra.mxu0 0.0
        %1347 = vmatpush.msra.mxu0 0.0
        %1348 = vmatpush.msra.mxu0 0.0
        %1349 = vmatpush.msra.mxu0 0.0
        %1350 = vmatpush.msra.mxu0 0.0
        %1351 = vmatpush.msra.mxu0 0.0
        %1352 = vmatpush.msra.mxu0 0.0
        %1353 = vmatpush.msra.mxu0 0.0
        %1354 = vmatpush.msra.mxu0 0.0
        %1355 = vmatpush.msra.mxu0 0.0
        %1356 = vmatpush.msra.mxu0 0.0
        %1357 = vmatpush.msra.mxu0 %v1337
        %1358 = vmatpush.msra.mxu0 %v1336
        %1359 = vmatpush.msra.mxu0 %v1335
        %1360 = vmatpush.msra.mxu0 %v1334
        %1361 = vmatmul.f32.gmra.mxu0 %v1340
        %v1362 = vpop.f32.mrf.mxu0
        %v1363 = vadd.f32 %v1338, %v1362
        %1364 = vmatmul.f32.gmra.mxu0 %v1343
        %v1365 = vpop.f32.mrf.mxu0
        %v1366 = vadd.f32 %v1338, %v1365
        %1367 = vdwg.mxu0
        %v1368 = vmul.f32 %v1363, 0.5
        %v1369 = vmul.f32 %v1366, 0.5
        %v1370 = vmul.f32 %v1363, 0.70710677
        %v1371 = vmul.f32 %v1366, 0.70710677
        %v1372 = vmul.f32 %v1370, %v1370
        %v1373 = vmin.f32 16.0, %v1372
        %v1374 = vmul.f32 %v1373, 2.1237322e-06
        %v1375 = vadd.f32 %v1374, 0.00028619796
        %v1376 = vmul.f32 %v1373, %v1375
        %v1377 = vadd.f32 %v1376, 0.0036580483
        %v1378 = vmul.f32 %v1373, %v1377
        %v1379 = vadd.f32 %v1378, 0.05243302
        %v1380 = vmul.f32 %v1373, %v1379
        %v1381 = vadd.f32 %v1380, 0.18741608
        %v1382 = vmul.f32 %v1373, %v1381
        %v1383 = vadd.f32 %v1382, 1.1283791
        %v1384 = vmul.f32 %v1370, %v1383
        %v1385 = vmul.f32 %v1373, 3.8918573e-05
        %v1386 = vadd.f32 %v1385, 0.001143296
        %v1387 = vmul.f32 %v1373, %v1386
        %v1388 = vadd.f32 %v1387, 0.014752088
        %v1389 = vmul.f32 %v1373, %v1388
        %v1390 = vadd.f32 %v1389, 0.112945676
        %v1391 = vmul.f32 %v1373, %v1390
        %v1392 = vadd.f32 %v1391, 0.4994258
        %v1393 = vmul.f32 %v1373, %v1392
        %v1394 = vadd.f32 %v1393, 1.0
        %v1395 = vrcp.pop %v1394
        %v1396 = vmul.f32 %v1394, %v1395
        %v1397 = vsub.f32 1.0, %v1396
        %v1398 = vmul.f32 %v1395, %v1397
        %v1399 = vadd.f32 %v1395, %v1398
        %vm1400 = vweird.f32 %v1394
        %vm1401 = vweird.f32 %v1395
        %vm1402 = vmor %vm1400, %vm1401
        %v1403 = vsel %vm1402, %v1395, %v1399
        %v1404 = vand.u32 2147483647, %v1394
        %vm1405 = vcmp.eq.f32.partialorder %v1404, 8.507059e+37
        %v1406 = vand.u32 %v1394, 2147483648
        %v1407 = vor.u32 1.1754944e-38, %v1406
        %v1408 = vsel %vm1405, %v1407, %v1403
        %v1409 = vmul.f32 %v1384, %v1408
        %v1410 = vmin.f32 %v1409, 1.0
        %v1411 = vmax.f32 %v1410, -1.0
        %v1412 = vmul.f32 %v1371, %v1371
        %v1413 = vmin.f32 16.0, %v1412
        %v1414 = vmul.f32 %v1413, 2.1237322e-06
        %v1415 = vadd.f32 %v1414, 0.00028619796
        %v1416 = vmul.f32 %v1413, %v1415
        %v1417 = vadd.f32 %v1416, 0.0036580483
        %v1418 = vmul.f32 %v1413, %v1417
        %v1419 = vadd.f32 %v1418, 0.05243302
        %v1420 = vmul.f32 %v1413, %v1419
        %v1421 = vadd.f32 %v1420, 0.18741608
        %v1422 = vmul.f32 %v1413, %v1421
        %v1423 = vadd.f32 %v1422, 1.1283791
        %v1424 = vmul.f32 %v1371, %v1423
        %v1425 = vmul.f32 %v1413, 3.8918573e-05
        %v1426 = vadd.f32 %v1425, 0.001143296
        %v1427 = vmul.f32 %v1413, %v1426
        %v1428 = vadd.f32 %v1427, 0.014752088
        %v1429 = vmul.f32 %v1413, %v1428
        %v1430 = vadd.f32 %v1429, 0.112945676
        %v1431 = vmul.f32 %v1413, %v1430
        %v1432 = vadd.f32 %v1431, 0.4994258
        %v1433 = vmul.f32 %v1413, %v1432
        %v1434 = vadd.f32 %v1433, 1.0
        %v1435 = vrcp.pop %v1434
        %v1436 = vmul.f32 %v1434, %v1435
        %v1437 = vsub.f32 1.0, %v1436
        %v1438 = vmul.f32 %v1435, %v1437
        %v1439 = vadd.f32 %v1435, %v1438
        %vm1440 = vweird.f32 %v1434
        %vm1441 = vweird.f32 %v1435
        %vm1442 = vmor %vm1440, %vm1441
        %v1443 = vsel %vm1442, %v1435, %v1439
        %v1444 = vand.u32 2147483647, %v1434
        %vm1445 = vcmp.eq.f32.partialorder %v1444, 8.507059e+37
        %v1446 = vand.u32 %v1434, 2147483648
        %v1447 = vor.u32 1.1754944e-38, %v1446
        %v1448 = vsel %vm1445, %v1447, %v1443
        %v1449 = vmul.f32 %v1424, %v1448
        %v1450 = vmin.f32 %v1449, 1.0
        %v1451 = vmax.f32 %v1450, -1.0
        %v1452 = vadd.f32 %v1411, 1.0
        %v1453 = vadd.f32 %v1451, 1.0
        %v1454 = vmul.f32 %v1368, %v1452
        %v1455 = vmul.f32 %v1369, %v1453
        %v1456 = vld [vmem:[%s455] sm:$0xff]
        %v1457 = vld [vmem:[%s455 + $0x8] sm:$0xff]
        %v1458 = vld [vmem:[%s455 + $0x10] sm:$0xff]
        %v1459 = vld [vmem:[%s455 + $0x18] sm:$0xff]
        %v1460 = vld [vmem:[%s455 + $0x20] sm:$0xff]
        %v1461 = vld [vmem:[%s455 + $0x28] sm:$0xff]
        %v1462 = vld [vmem:[%s455 + $0x30] sm:$0xff]
        %v1463 = vld [vmem:[%s455 + $0x38] sm:$0xff]
        %v1464 = vperm.slane %v491, 6
        %vm1465 = vcmask 523264
        %v1467 = vsel %vm1465, %v1454, 0
        %v1470 = vsel %vm1465, %v1455, 0
        %1472 = vmatpush.msra.mxu0 0.0
        %1473 = vmatpush.msra.mxu0 0.0
        %1474 = vmatpush.msra.mxu0 0.0
        %1475 = vmatpush.msra.mxu0 0.0
        %1476 = vmatpush.msra.mxu0 0.0
        %1477 = vmatpush.msra.mxu0 0.0
        %1478 = vmatpush.msra.mxu0 0.0
        %1479 = vmatpush.msra.mxu0 0.0
        %1480 = vmatpush.msra.mxu0 %v1463
        %1481 = vmatpush.msra.mxu0 %v1462
        %1482 = vmatpush.msra.mxu0 %v1461
        %1483 = vmatpush.msra.mxu0 %v1460
        %1484 = vmatpush.msra.mxu0 %v1459
        %1485 = vmatpush.msra.mxu0 %v1458
        %1486 = vmatpush.msra.mxu0 %v1457
        %1487 = vmatpush.msra.mxu0 %v1456
        %1488 = vmatmul.f32.gmra.mxu0 %v1467
        %v1489 = vpop.f32.mrf.mxu0
        %v1490 = vadd.f32 %v1464, %v1489
        %1491 = vmatmul.f32.gmra.mxu0 %v1470
        %v1492 = vpop.f32.mrf.mxu0
        %v1493 = vadd.f32 %v1464, %v1492
        %1494 = vdwg.mxu0
        %v1495 = vadd.f32 %v1490, %v1282
        %v1496 = vadd.f32 %v1493, %v1283
        %1497 = vst.msk [vmem:[#allocation2] sm:$0xff] %vm497, %v1495
        %1498 = vst.msk [vmem:[#allocation2 + $0x8] sm:$0xff] %vm497, %v1496
        %p1499 = scmp.eq.s32.totalorder %s26, 1
        // Predicated region
        $region61: #{tpu_custom_call.1} parent=51 // pred_check
          %p1500 = pneg %p1499
        $region62: #{tpu_custom_call.1} parent=51 // pred_check_branch
          %1502 = sbr.rel (%p1500) target = $region64
        $region63: #{tpu_custom_call.1} parent=51 // pred_region
          %v1503 = vsel %vm497, %v1495, 0.0
          %1504 = vadd.xlane.f32.xlu0 %v1503
          %v1505 = vpop.xlane.xlu0 %1504
          %v1506 = vsel %vm497, %v1496, 0.0
          %1507 = vadd.xlane.f32.xlu0 %v1506
          %v1508 = vpop.xlane.xlu0 %1507
          %v1509 = vmul.f32 %v1505, %v510
          %v1510 = vmul.f32 %v1508, %v510
          %v1511 = vsub.f32 %v1495, %v1509
          %v1512 = vsub.f32 %v1496, %v1510
          %v1513 = vmul.f32 %v1511, %v1511
          %v1514 = vmul.f32 %v1512, %v1512
          %v1515 = vsel %vm497, %v1513, 0.0
          %1516 = vadd.xlane.f32.xlu0 %v1515
          %v1517 = vpop.xlane.xlu0 %1516
          %v1518 = vsel %vm497, %v1514, 0.0
          %1519 = vadd.xlane.f32.xlu0 %v1518
          %v1520 = vpop.xlane.xlu0 %1519
          %v1521 = vmul.f32 %v1517, %v510
          %v1522 = vmul.f32 %v1520, %v510
          %v1523 = vadd.f32 %v1521, 1e-05
          %v1524 = vadd.f32 %v1522, 1e-05
          %v1525 = vrsqrt.pop %v1523
          %v1526 = vmul.f32 %v1525, %v1523
          %v1527 = vmul.f32 %v1526, %v1525
          %v1528 = vmul.f32 0.5, %v1527
          %v1529 = vsub.f32 1.5, %v1528
          %v1530 = vmul.f32 %v1525, %v1529
          %vm1531 = vweird.f32 %v1523
          %vm1532 = vweird.f32 %v1525
          %vm1533 = vmor %vm1531, %vm1532
          %v1534 = vsel %vm1533, %v1525, %v1530
          %v1535 = vrsqrt.pop %v1524
          %v1536 = vmul.f32 %v1535, %v1524
          %v1537 = vmul.f32 %v1536, %v1535
          %v1538 = vmul.f32 0.5, %v1537
          %v1539 = vsub.f32 1.5, %v1538
          %v1540 = vmul.f32 %v1535, %v1539
          %vm1541 = vweird.f32 %v1524
          %vm1542 = vweird.f32 %v1535
          %vm1543 = vmor %vm1541, %vm1542
          %v1544 = vsel %vm1543, %v1535, %v1540
          %v1545 = vmul.f32 %v1511, %v1534
          %v1546 = vmul.f32 %v1512, %v1544
          %v1547 = vperm.slane %v491, 7
          %v1548 = vmul.f32 %v1545, %v1547
          %v1549 = vmul.f32 %v1546, %v1547
          %v1550 = vperm.slane %v492, 0
          %v1551 = vadd.f32 %v1548, %v1550
          %v1552 = vadd.f32 %v1549, %v1550
          %1553 = vst.msk [vmem:[#allocation8] sm:$0xff] %vm497, %v1551
          %1554 = vst.msk [vmem:[#allocation8 + $0x8] sm:$0xff] %vm497, %v1552
        $region64: #{tpu_custom_call.1} parent=51 // pred_fallthru
          _
        // Predicated region
        $region65: #{tpu_custom_call.1} parent=51 // pred_check
          %p1555 = pneg %p259
        $region66: #{tpu_custom_call.1} parent=51 // pred_check_branch
          %1557 = sbr.rel (%p1555) target = $region68
        $region67: #{tpu_custom_call.1} parent=51 // pred_region
          %s1558 = smul.u32 2, %s25
          %1560 = vsyncadd [#allocation7], 0
          %s1561 = smul.addr %s1558, 8
          %s1562 = scalar_lea.hbm %s8, %s1561
          %s1563 = sshll.u32 [#allocation8], 4
          %s1564 = int_to_ptr.vmem [resolvable:$true] %s1563
          %s1565 = sshll.u32 %s1562, 4
          %s1566 = int_to_ptr.hbm [resolvable:$true] %s1565
          %1571 = dma.vmem_to_hbm [thread:$0]  %s1564, 256, %s1566, [#allocation7], 128, 128, 8
        $region68: #{tpu_custom_call.1} parent=51 // pred_fallthru
          _
        // Predicated region
        $region69: #{tpu_custom_call.1} parent=51 // pred_check
          %p1572 = pneg %p259
        $region70: #{tpu_custom_call.1} parent=51 // pred_check_branch
          %1574 = sbr.rel (%p1572) target = $region72
        $region71: #{tpu_custom_call.1} parent=51 // pred_region
          %1576 = dma.done [#allocation7], 256
        $region72: #{tpu_custom_call.1} parent=51 // pred_fallthru
          _
      $region52: #{tpu_custom_call.1} parent=5 // pred_fallthru
        _
      %p1577 = scmp.le.s32.totalorder 2, %s16
      // Predicated region
      $region73: #{tpu_custom_call.1} parent=5 // pred_check
        %p1578 = pneg %p1577
      $region74: #{tpu_custom_call.1} parent=5 // pred_check_branch
        %1580 = sbr.rel (%p1578) target = $region76
      $region75: #{tpu_custom_call.1} parent=5 // pred_region
        %s1581 = ssub.s32 %s16, 2
      $region76: #{tpu_custom_call.1} parent=5 // pred_fallthru
        _
    $region6: #{tpu_custom_call.1} parent=1 // loop_footer
      %s20 = sadd.s32 1, %s16
    $region7: #{tpu_custom_call.1} parent=1 // loop_footer_branch
      %15 = sbr.rel target = $region3
    $region8: #{tpu_custom_call.1} parent=1 // loop_exit
      _
    %1582 = vsyncpa [#allocation6], 1
    %s1583 = scalar_lea.sflag [#allocation6], 1
    %1584 = vsyncpa %s1583, 1
    %1585 = vsyncpa [#allocation7], 1
    %s1586 = scalar_lea.sflag [#allocation7], 1
    %1587 = vsyncpa %s1586, 1

</llo_original>
